<compile_context>
chip_gen: v7x
topology: tpu7x:2x2x1
jax: 0.10.0
libtpu: 0.0.40
codegen_flags: <defaults>
</compile_context>

<pallas_src>
import jax
import jax.numpy as jnp
import numpy as np
from jax.experimental import pallas as pl
from jax.experimental.pallas import tpu as pltpu

CIN = 3        # conv1 in-channels
COUT = 3       # conv2 out-channels
KH = KW = 3    # kernel size
EPS = 1e-5     # BatchNorm2d eps


def _make_kernel(n, h, w, d):
    """Fused conv1 -> BN(train) -> ReLU -> conv2 kernel for static shapes."""
    p = n * h * w

    def kernel(xcol_ref, w1_ref, w2_ref, mask_ref, vec_ref, out_ref, ycol_ref):
        # ---- conv1: single MXU contraction (D, 27) @ (27, P) -> (D, P), f32 acc ----
        acc = jnp.dot(w1_ref[...], xcol_ref[...],
                      preferred_element_type=jnp.float32)
        b1 = vec_ref[:, 0:1]       # (D, 1)
        gamma = vec_ref[:, 1:2]    # (D, 1)
        beta = vec_ref[:, 2:3]     # (D, 1)
        hpre = acc + b1

        # ---- BatchNorm2d (training mode): batch stats over N*H*W per channel ----
        inv_p = 1.0 / float(p)
        mean = jnp.sum(hpre, axis=1, keepdims=True) * inv_p
        xc = hpre - mean
        var = jnp.sum(xc * xc, axis=1, keepdims=True) * inv_p        # biased variance
        y = xc * (gamma * jax.lax.rsqrt(var + EPS)) + beta

        # ---- ReLU ----
        y = jnp.maximum(y, 0.0)                                      # (D, P) f32

        # ---- conv2 im2col in VMEM: 9 lane-rolled, boundary-masked copies of y ----
        # ycol[t*D:(t+1)*D, p] = y[:, p + dy*W + dx] if (yy+dy, xx+dx) in-image else 0
        for t in range(KH * KW):
            dy, dx = t // KW - 1, t % KW - 1
            shift = (-(dy * w + dx)) % p            # static; jnp.roll convention
            shifted = pltpu.roll(y, shift=shift, axis=1) if shift else y
            ycol_ref[t * d:(t + 1) * d, :] = (
                shifted * mask_ref[t:t + 1, :]).astype(ycol_ref.dtype)

        # ---- conv2: single MXU contraction (3, 9*D) @ (9*D, P) -> (3, P) ----
        out = jnp.dot(w2_ref[...], ycol_ref[...],
                      preferred_element_type=jnp.float32)
        b2 = vec_ref[0:COUT, 3:4]                  # (3, 1)
        out_ref[...] = out + b2                    # lane-dense (3, P) store

    return kernel


@jax.jit
def simple_cnn_forward(img, w1_col, w2_col, vec):
    """img: (N, 3, H, W) float32 NCHW  ->  (N, 3, H, W) float32."""
    n, cin, h, w = img.shape
    assert cin == CIN
    d = w1_col.shape[0]
    p = n * h * w

    # Host-side (XLA-fused) im2col of the zero-padded input -> lane-dense (27, P) bf16.
    xpad = jnp.pad(img, ((0, 0), (0, 0), (1, 1), (1, 1)))
    cols = []
    for t in range(KH * KW):
        ky, kx = t // KW, t % KW
        win = xpad[:, :, ky:ky + h, kx:kx + w]                        # (N, 3, H, W)
        cols.append(jnp.transpose(win, (1, 0, 2, 3)).reshape(CIN, p))
    xcol = jnp.concatenate(cols, axis=0).astype(jnp.bfloat16)         # (27, P)

    # Per-tap validity masks over the flattened P axis (pure-constant, XLA folds them).
    pidx = jnp.arange(p, dtype=jnp.int32)
    yy = (pidx // w) % h
    xx = pidx % w
    mrows = []
    for t in range(KH * KW):
        dy, dx = t // KW - 1, t % KW - 1
        mrows.append((yy + dy >= 0) & (yy + dy < h) & (xx + dx >= 0) & (xx + dx < w))
    masks = jnp.stack(mrows, axis=0).astype(jnp.float32)              # (9, P)

    out_slab = pl.pallas_call(
        _make_kernel(n, h, w, d),
        out_shape=jax.ShapeDtypeStruct((COUT, p), jnp.float32),
        in_specs=[
            pl.BlockSpec((KH * KW * CIN, p), lambda: (0, 0)),     # xcol  (27, P)  bf16
            pl.BlockSpec((d, KH * KW * CIN), lambda: (0, 0)),     # w1    (D, 27)  bf16
            pl.BlockSpec((COUT, KH * KW * d), lambda: (0, 0)),    # w2    (3, 9D)  bf16
            pl.BlockSpec((KH * KW, p), lambda: (0, 0)),           # masks (9, P)   f32
            pl.BlockSpec((d, 4), lambda: (0, 0)),                 # vec   (D, 4)   f32
        ],
        out_specs=pl.BlockSpec((COUT, p), lambda: (0, 0)),        # out   (3, P)   f32
        scratch_shapes=[pltpu.VMEM((KH * KW * d, p), jnp.bfloat16)],  # conv2 im2col
    )(xcol, w1_col, w2_col, masks, vec)

    # (3, P) lane-dense slab -> NCHW, done by XLA outside the kernel.
    return jnp.transpose(out_slab.reshape(COUT, n, h, w), (1, 0, 2, 3))


class SimpleCNNPallas:
    """JAX/Pallas port of SimpleCNN(D): conv1 -> BatchNorm2d -> ReLU -> conv2."""

    def __init__(self, key, D=32):
        self.D = D
        k1, k2, k3, k4 = jax.random.split(key, 4)
        # torch.nn.Conv2d default init: U(-k, k), k = 1/sqrt(fan_in)
        bound1 = 1.0 / float(np.sqrt(CIN * KH * KW))
        bound2 = 1.0 / float(np.sqrt(D * KH * KW))
        conv1_w = jax.random.uniform(k1, (D, CIN, KH, KW), jnp.float32, -bound1, bound1)
        conv1_b = jax.random.uniform(k2, (D,), jnp.float32, -bound1, bound1)
        conv2_w = jax.random.uniform(k3, (COUT, D, KH, KW), jnp.float32, -bound2, bound2)
        conv2_b = jax.random.uniform(k4, (COUT,), jnp.float32, -bound2, bound2)
        gamma = jnp.ones((D,), jnp.float32)   # BatchNorm2d default affine params
        beta = jnp.zeros((D,), jnp.float32)

        # Raw OIHW weights kept for the pure-JAX reference.
        self.conv1_w, self.conv1_b = conv1_w, conv1_b
        self.conv2_w, self.conv2_b = conv2_w, conv2_b
        self.gamma, self.beta = gamma, beta

        # ---- host-side repack (once) into matmul-ready bf16 MXU operands ----
        # (O, I, KH, KW) -> (O, KH*KW*I): column index = (ky*KW + kx)*I + i
        self.w1_col = jnp.transpose(conv1_w, (0, 2, 3, 1)) \
                         .reshape(D, KH * KW * CIN).astype(jnp.bfloat16)
        self.w2_col = jnp.transpose(conv2_w, (0, 2, 3, 1)) \
                         .reshape(COUT, KH * KW * D).astype(jnp.bfloat16)
        # Pack all small per-channel vectors into one (D, 4) f32 slab -> single DMA:
        # columns = [conv1_b | gamma | beta | conv2_b(padded)]
        vec = jnp.zeros((D, 4), jnp.float32)
        vec = vec.at[:, 0].set(conv1_b).at[:, 1].set(gamma).at[:, 2].set(beta)
        vec = vec.at[:COUT, 3].set(conv2_b)
        self.vec = vec

    def __call__(self, img):
        return simple_cnn_forward(img, self.w1_col, self.w2_col, self.vec)


def _reference(model, img):
    """Pure-JAX reference (training-mode BatchNorm), full-precision convolutions."""
    dn1 = jax.lax.conv_dimension_numbers(img.shape, model.conv1_w.shape,
                                         ("NCHW", "OIHW", "NCHW"))
    h = jax.lax.conv_general_dilated(
        img, model.conv1_w, (1, 1), "SAME", dimension_numbers=dn1,
        precision=jax.lax.Precision.HIGHEST) + model.conv1_b[None, :, None, None]
    mean = jnp.mean(h, axis=(0, 2, 3), keepdims=True)
    var = jnp.var(h, axis=(0, 2, 3), keepdims=True)      # biased, as in torch training BN
    hn = (h - mean) * jax.lax.rsqrt(var + EPS)
    hn = hn * model.gamma[None, :, None, None] + model.beta[None, :, None, None]
    hr = jnp.maximum(hn, 0.0)
    dn2 = jax.lax.conv_dimension_numbers(hr.shape, model.conv2_w.shape,
                                         ("NCHW", "OIHW", "NCHW"))
    out = jax.lax.conv_general_dilated(
        hr, model.conv2_w, (1, 1), "SAME", dimension_numbers=dn2,
        precision=jax.lax.Precision.HIGHEST) + model.conv2_b[None, :, None, None]
    return out


if __name__ == "__main__":
    root = jax.random.PRNGKey(0)
    k_params, k_img = jax.random.split(root)

    model = SimpleCNNPallas(k_params, D=32)
    img = jax.random.normal(k_img, (2, CIN, 16, 16), jnp.float32)   # small NCHW batch

    out = jax.block_until_ready(model(img))
    ref = jax.block_until_ready(_reference(model, img))

    assert out.shape == (2, COUT, 16, 16) and out.dtype == jnp.float32
    # Tolerance covers bf16 MXU operands (f32 accumulation) vs HIGHEST-precision f32
    # XLA convolutions plus accumulation-order differences.
    assert jnp.allclose(out, ref, rtol=3e-2, atol=3e-2), float(jnp.max(jnp.abs(out - ref)))
    print("KERNEL_OK")
</pallas_src>

<mosaic_0001>
module attributes {stable_mosaic.version = 11 : i64} {
  func.func @kernel(%arg0: memref<27x512xbf16, #tpu.memory_space<vmem>>, %arg1: memref<32x27xbf16, #tpu.memory_space<vmem>>, %arg2: memref<3x288xbf16, #tpu.memory_space<vmem>>, %arg3: memref<9x512xf32, #tpu.memory_space<vmem>>, %arg4: memref<32x4xf32, #tpu.memory_space<vmem>>, %arg5: memref<3x512xf32, #tpu.memory_space<vmem>>, %arg6: memref<288x512xbf16, #tpu.memory_space<vmem>>) attributes {dimension_semantics = [], scalar_prefetch = 0 : i64, scratch_operands = 1 : i64, tpu.core_type = #tpu.core_type<tc>} {
    %c0 = arith.constant 0 : index
    %c0_0 = arith.constant 0 : index
    %0 = vector.load %arg1[%c0, %c0_0] : memref<32x27xbf16, #tpu.memory_space<vmem>>, vector<32x27xbf16>
    %c0_1 = arith.constant 0 : index
    %c0_2 = arith.constant 0 : index
    %1 = vector.load %arg0[%c0_1, %c0_2] : memref<27x512xbf16, #tpu.memory_space<vmem>>, vector<27x512xbf16>
    %cst = arith.constant dense<0.000000e+00> : vector<32x512xf32>
    %2 = tpu.matmul %0, %1, %cst {dimension_numbers = #tpu.dot_dimension_numbers<[1], [0], [0], [1], [0, 0, 1, 1], [], []>} : vector<32x27xbf16>, vector<27x512xbf16>, vector<32x512xf32> -> vector<32x512xf32>
    %c0_3 = arith.constant 0 : index
    %c0_4 = arith.constant 0 : index
    %3 = vector.load %arg4[%c0_3, %c0_4] : memref<32x4xf32, #tpu.memory_space<vmem>>, vector<32x1xf32>
    %c0_5 = arith.constant 0 : index
    %c1 = arith.constant 1 : index
    %4 = vector.load %arg4[%c0_5, %c1] : memref<32x4xf32, #tpu.memory_space<vmem>>, vector<32x1xf32>
    %c0_6 = arith.constant 0 : index
    %c2 = arith.constant 2 : index
    %5 = vector.load %arg4[%c0_6, %c2] : memref<32x4xf32, #tpu.memory_space<vmem>>, vector<32x1xf32>
    %6 = vector.broadcast %3 : vector<32x1xf32> to vector<32x512xf32>
    %7 = arith.addf %2, %6 : vector<32x512xf32>
    %cst_7 = arith.constant dense<0.000000e+00> : vector<32xf32>
    %8 = vector.multi_reduction <add>, %7, %cst_7 [1] : vector<32x512xf32> to vector<32xf32>
    %9 = vector.shape_cast %8 : vector<32xf32> to vector<32x1xf32>
    %cst_8 = arith.constant 0.001953125 : f32
    %10 = vector.broadcast %cst_8 : f32 to vector<32x1xf32>
    %11 = arith.mulf %9, %10 : vector<32x1xf32>
    %12 = vector.broadcast %11 : vector<32x1xf32> to vector<32x512xf32>
    %13 = arith.subf %7, %12 : vector<32x512xf32>
    %14 = arith.mulf %13, %13 : vector<32x512xf32>
    %cst_9 = arith.constant dense<0.000000e+00> : vector<32xf32>
    %15 = vector.multi_reduction <add>, %14, %cst_9 [1] : vector<32x512xf32> to vector<32xf32>
    %16 = vector.shape_cast %15 : vector<32xf32> to vector<32x1xf32>
    %cst_10 = arith.constant 0.001953125 : f32
    %17 = vector.broadcast %cst_10 : f32 to vector<32x1xf32>
    %18 = arith.mulf %16, %17 : vector<32x1xf32>
    %cst_11 = arith.constant 9.99999974E-6 : f32
    %19 = vector.broadcast %cst_11 : f32 to vector<32x1xf32>
    %20 = arith.addf %18, %19 : vector<32x1xf32>
    %21 = math.rsqrt %20 : vector<32x1xf32>
    %22 = arith.mulf %4, %21 : vector<32x1xf32>
    %23 = vector.broadcast %22 : vector<32x1xf32> to vector<32x512xf32>
    %24 = arith.mulf %13, %23 : vector<32x512xf32>
    %25 = vector.broadcast %5 : vector<32x1xf32> to vector<32x512xf32>
    %26 = arith.addf %24, %25 : vector<32x512xf32>
    %cst_12 = arith.constant 0.000000e+00 : f32
    %27 = vector.broadcast %cst_12 : f32 to vector<32x512xf32>
    %28 = arith.maximumf %26, %27 : vector<32x512xf32>
    %c17_i32 = arith.constant 17 : i32
    %29 = tpu.dynamic_rotate %28 by %c17_i32 dim 1 : vector<32x512xf32>, i32 -> vector<32x512xf32>
    %c0_13 = arith.constant 0 : index
    %c0_14 = arith.constant 0 : index
    %30 = vector.load %arg3[%c0_13, %c0_14] : memref<9x512xf32, #tpu.memory_space<vmem>>, vector<1x512xf32>
    %31 = vector.broadcast %30 : vector<1x512xf32> to vector<32x512xf32>
    %32 = arith.mulf %29, %31 : vector<32x512xf32>
    %33 = arith.truncf %32 : vector<32x512xf32> to vector<32x512xbf16>
    %c0_15 = arith.constant 0 : index
    %c0_16 = arith.constant 0 : index
    %34 = vector.load %arg6[%c0_15, %c0_16] : memref<288x512xbf16, #tpu.memory_space<vmem>>, vector<32x512xbf16>
    tpu.vector_store %arg6[%c0_15, %c0_16], %33 {strides = array<i32>} : memref<288x512xbf16, #tpu.memory_space<vmem>>, vector<32x512xbf16>,
    %c16_i32 = arith.constant 16 : i32
    %35 = tpu.dynamic_rotate %28 by %c16_i32 dim 1 : vector<32x512xf32>, i32 -> vector<32x512xf32>
    %c1_17 = arith.constant 1 : index
    %c0_18 = arith.constant 0 : index
    %36 = vector.load %arg3[%c1_17, %c0_18] : memref<9x512xf32, #tpu.memory_space<vmem>>, vector<1x512xf32>
    %37 = vector.broadcast %36 : vector<1x512xf32> to vector<32x512xf32>
    %38 = arith.mulf %35, %37 : vector<32x512xf32>
    %39 = arith.truncf %38 : vector<32x512xf32> to vector<32x512xbf16>
    %c32 = arith.constant 32 : index
    %c0_19 = arith.constant 0 : index
    %40 = vector.load %arg6[%c32, %c0_19] : memref<288x512xbf16, #tpu.memory_space<vmem>>, vector<32x512xbf16>
    tpu.vector_store %arg6[%c32, %c0_19], %39 {strides = array<i32>} : memref<288x512xbf16, #tpu.memory_space<vmem>>, vector<32x512xbf16>,
    %c15_i32 = arith.constant 15 : i32
    %41 = tpu.dynamic_rotate %28 by %c15_i32 dim 1 : vector<32x512xf32>, i32 -> vector<32x512xf32>
    %c2_20 = arith.constant 2 : index
    %c0_21 = arith.constant 0 : index
    %42 = vector.load %arg3[%c2_20, %c0_21] : memref<9x512xf32, #tpu.memory_space<vmem>>, vector<1x512xf32>
    %43 = vector.broadcast %42 : vector<1x512xf32> to vector<32x512xf32>
    %44 = arith.mulf %41, %43 : vector<32x512xf32>
    %45 = arith.truncf %44 : vector<32x512xf32> to vector<32x512xbf16>
    %c64 = arith.constant 64 : index
    %c0_22 = arith.constant 0 : index
    %46 = vector.load %arg6[%c64, %c0_22] : memref<288x512xbf16, #tpu.memory_space<vmem>>, vector<32x512xbf16>
    tpu.vector_store %arg6[%c64, %c0_22], %45 {strides = array<i32>} : memref<288x512xbf16, #tpu.memory_space<vmem>>, vector<32x512xbf16>,
    %c1_i32 = arith.constant 1 : i32
    %47 = tpu.dynamic_rotate %28 by %c1_i32 dim 1 : vector<32x512xf32>, i32 -> vector<32x512xf32>
    %c3 = arith.constant 3 : index
    %c0_23 = arith.constant 0 : index
    %48 = vector.load %arg3[%c3, %c0_23] : memref<9x512xf32, #tpu.memory_space<vmem>>, vector<1x512xf32>
    %49 = vector.broadcast %48 : vector<1x512xf32> to vector<32x512xf32>
    %50 = arith.mulf %47, %49 : vector<32x512xf32>
    %51 = arith.truncf %50 : vector<32x512xf32> to vector<32x512xbf16>
    %c96 = arith.constant 96 : index
    %c0_24 = arith.constant 0 : index
    %52 = vector.load %arg6[%c96, %c0_24] : memref<288x512xbf16, #tpu.memory_space<vmem>>, vector<32x512xbf16>
    tpu.vector_store %arg6[%c96, %c0_24], %51 {strides = array<i32>} : memref<288x512xbf16, #tpu.memory_space<vmem>>, vector<32x512xbf16>,
    %c4 = arith.constant 4 : index
    %c0_25 = arith.constant 0 : index
    %53 = vector.load %arg3[%c4, %c0_25] : memref<9x512xf32, #tpu.memory_space<vmem>>, vector<1x512xf32>
    %54 = vector.broadcast %53 : vector<1x512xf32> to vector<32x512xf32>
    %55 = arith.mulf %28, %54 : vector<32x512xf32>
    %56 = arith.truncf %55 : vector<32x512xf32> to vector<32x512xbf16>
    %c128 = arith.constant 128 : index
    %c0_26 = arith.constant 0 : index
    %57 = vector.load %arg6[%c128, %c0_26] : memref<288x512xbf16, #tpu.memory_space<vmem>>, vector<32x512xbf16>
    tpu.vector_store %arg6[%c128, %c0_26], %56 {strides = array<i32>} : memref<288x512xbf16, #tpu.memory_space<vmem>>, vector<32x512xbf16>,
    %c511_i32 = arith.constant 511 : i32
    %58 = tpu.dynamic_rotate %28 by %c511_i32 dim 1 : vector<32x512xf32>, i32 -> vector<32x512xf32>
    %c5 = arith.constant 5 : index
    %c0_27 = arith.constant 0 : index
    %59 = vector.load %arg3[%c5, %c0_27] : memref<9x512xf32, #tpu.memory_space<vmem>>, vector<1x512xf32>
    %60 = vector.broadcast %59 : vector<1x512xf32> to vector<32x512xf32>
    %61 = arith.mulf %58, %60 : vector<32x512xf32>
    %62 = arith.truncf %61 : vector<32x512xf32> to vector<32x512xbf16>
    %c160 = arith.constant 160 : index
    %c0_28 = arith.constant 0 : index
    %63 = vector.load %arg6[%c160, %c0_28] : memref<288x512xbf16, #tpu.memory_space<vmem>>, vector<32x512xbf16>
    tpu.vector_store %arg6[%c160, %c0_28], %62 {strides = array<i32>} : memref<288x512xbf16, #tpu.memory_space<vmem>>, vector<32x512xbf16>,
    %c497_i32 = arith.constant 497 : i32
    %64 = tpu.dynamic_rotate %28 by %c497_i32 dim 1 : vector<32x512xf32>, i32 -> vector<32x512xf32>
    %c6 = arith.constant 6 : index
    %c0_29 = arith.constant 0 : index
    %65 = vector.load %arg3[%c6, %c0_29] : memref<9x512xf32, #tpu.memory_space<vmem>>, vector<1x512xf32>
    %66 = vector.broadcast %65 : vector<1x512xf32> to vector<32x512xf32>
    %67 = arith.mulf %64, %66 : vector<32x512xf32>
    %68 = arith.truncf %67 : vector<32x512xf32> to vector<32x512xbf16>
    %c192 = arith.constant 192 : index
    %c0_30 = arith.constant 0 : index
    %69 = vector.load %arg6[%c192, %c0_30] : memref<288x512xbf16, #tpu.memory_space<vmem>>, vector<32x512xbf16>
    tpu.vector_store %arg6[%c192, %c0_30], %68 {strides = array<i32>} : memref<288x512xbf16, #tpu.memory_space<vmem>>, vector<32x512xbf16>,
    %c496_i32 = arith.constant 496 : i32
    %70 = tpu.dynamic_rotate %28 by %c496_i32 dim 1 : vector<32x512xf32>, i32 -> vector<32x512xf32>
    %c7 = arith.constant 7 : index
    %c0_31 = arith.constant 0 : index
    %71 = vector.load %arg3[%c7, %c0_31] : memref<9x512xf32, #tpu.memory_space<vmem>>, vector<1x512xf32>
    %72 = vector.broadcast %71 : vector<1x512xf32> to vector<32x512xf32>
    %73 = arith.mulf %70, %72 : vector<32x512xf32>
    %74 = arith.truncf %73 : vector<32x512xf32> to vector<32x512xbf16>
    %c224 = arith.constant 224 : index
    %c0_32 = arith.constant 0 : index
    %75 = vector.load %arg6[%c224, %c0_32] : memref<288x512xbf16, #tpu.memory_space<vmem>>, vector<32x512xbf16>
    tpu.vector_store %arg6[%c224, %c0_32], %74 {strides = array<i32>} : memref<288x512xbf16, #tpu.memory_space<vmem>>, vector<32x512xbf16>,
    %c495_i32 = arith.constant 495 : i32
    %76 = tpu.dynamic_rotate %28 by %c495_i32 dim 1 : vector<32x512xf32>, i32 -> vector<32x512xf32>
    %c8 = arith.constant 8 : index
    %c0_33 = arith.constant 0 : index
    %77 = vector.load %arg3[%c8, %c0_33] : memref<9x512xf32, #tpu.memory_space<vmem>>, vector<1x512xf32>
    %78 = vector.broadcast %77 : vector<1x512xf32> to vector<32x512xf32>
    %79 = arith.mulf %76, %78 : vector<32x512xf32>
    %80 = arith.truncf %79 : vector<32x512xf32> to vector<32x512xbf16>
    %c256 = arith.constant 256 : index
    %c0_34 = arith.constant 0 : index
    %81 = vector.load %arg6[%c256, %c0_34] : memref<288x512xbf16, #tpu.memory_space<vmem>>, vector<32x512xbf16>
    tpu.vector_store %arg6[%c256, %c0_34], %80 {strides = array<i32>} : memref<288x512xbf16, #tpu.memory_space<vmem>>, vector<32x512xbf16>,
    %c0_35 = arith.constant 0 : index
    %c0_36 = arith.constant 0 : index
    %82 = vector.load %arg2[%c0_35, %c0_36] : memref<3x288xbf16, #tpu.memory_space<vmem>>, vector<3x288xbf16>
    %c0_37 = arith.constant 0 : index
    %c0_38 = arith.constant 0 : index
    %83 = vector.load %arg6[%c0_37, %c0_38] : memref<288x512xbf16, #tpu.memory_space<vmem>>, vector<288x512xbf16>
    %cst_39 = arith.constant dense<0.000000e+00> : vector<3x512xf32>
    %84 = tpu.matmul %82, %83, %cst_39 {dimension_numbers = #tpu.dot_dimension_numbers<[1], [0], [0], [1], [0, 0, 1, 1], [], []>} : vector<3x288xbf16>, vector<288x512xbf16>, vector<3x512xf32> -> vector<3x512xf32>
    %c0_40 = arith.constant 0 : index
    %c3_41 = arith.constant 3 : index
    %85 = vector.load %arg4[%c0_40, %c3_41] : memref<32x4xf32, #tpu.memory_space<vmem>>, vector<3x1xf32>
    %86 = vector.broadcast %85 : vector<3x1xf32> to vector<3x512xf32>
    %87 = arith.addf %84, %86 : vector<3x512xf32>
    %c0_42 = arith.constant 0 : index
    %c0_43 = arith.constant 0 : index
    %88 = vector.load %arg5[%c0_42, %c0_43] : memref<3x512xf32, #tpu.memory_space<vmem>>, vector<3x512xf32>
    tpu.vector_store %arg5[%c0_42, %c0_43], %87 {strides = array<i32>} : memref<3x512xf32, #tpu.memory_space<vmem>>, vector<3x512xf32>,
    return
  }
}

</mosaic_0001>

<llo_original>
// kernel: simple_cnn_forward.1
$region0: #{simple_cnn_forward.1}
  #allocation0 [shape = 'u32[]', space=smem, size = 0x4, offset = 0x4, fixed_abs, tag = 'smem constant byte address 0x4 - core index']
  #allocation1 [shape = 'u32[144,128]{1,0:T(1,128)}', space=vmem, size = 0x12000, scoped, tag = 'internal scratch']
  #allocation2 [shape = 'bf16[288,512]{1,0:T(16,128)(2,1)}', space=vmem, size = 0x48000, scoped, tag = 'scratch operand']
  %s0 = inlined_call_operand.vmem [shape: bf16[27,512], index: 0, kind: input, shape index: {}]
  %s1 = inlined_call_operand.vmem [shape: bf16[32,27], index: 1, kind: input, shape index: {}]
  %s2 = inlined_call_operand.vmem [shape: bf16[3,288], index: 2, kind: input, shape index: {}]
  %s3 = inlined_call_operand.vmem [shape: f32[9,512], index: 3, kind: input, shape index: {}]
  %s4 = inlined_call_operand.vmem [shape: f32[32,4], index: 4, kind: input, shape index: {}]
  %s5 = inlined_call_operand.vmem [shape: f32[3,512], index: 5, kind: output, shape index: {}]
  %s6 = sld [smem:[#allocation0]]
  $region30: #{simple_cnn_forward.1} parent=0
    _
  %s8 = ssub.s32 1, %s6
  %s9 = scalar_select 0, %s8, %s6
  // Predicated region
  $region2: #{simple_cnn_forward.1} parent=0 // pred_check
    _
  $region3: #{simple_cnn_forward.1} parent=0 // pred_check_branch
    %11 = sbr.rel (0) target = $region5
  $region4: #{simple_cnn_forward.1} parent=0 // pred_region
    _
  $region5: #{simple_cnn_forward.1} parent=0 // pred_fallthru
    _
  // Predicated region
  $region6: #{simple_cnn_forward.1} parent=0 // pred_check
    _
  $region7: #{simple_cnn_forward.1} parent=0 // pred_check_branch
    %13 = sbr.rel (0) target = $region9
  $region8: #{simple_cnn_forward.1} parent=0 // pred_region
    _
  $region9: #{simple_cnn_forward.1} parent=0 // pred_fallthru
    _
  // Predicated region
  $region10: #{simple_cnn_forward.1} parent=0 // pred_check
    _
  $region11: #{simple_cnn_forward.1} parent=0 // pred_check_branch
    %15 = sbr.rel (0) target = $region13
  $region12: #{simple_cnn_forward.1} parent=0 // pred_region
    _
  $region13: #{simple_cnn_forward.1} parent=0 // pred_fallthru
    _
  // Predicated region
  $region14: #{simple_cnn_forward.1} parent=0 // pred_check
    _
  $region15: #{simple_cnn_forward.1} parent=0 // pred_check_branch
    %17 = sbr.rel (0) target = $region17
  $region16: #{simple_cnn_forward.1} parent=0 // pred_region
    _
  $region17: #{simple_cnn_forward.1} parent=0 // pred_fallthru
    _
  // Predicated region
  $region18: #{simple_cnn_forward.1} parent=0 // pred_check
    _
  $region19: #{simple_cnn_forward.1} parent=0 // pred_check_branch
    %19 = sbr.rel (0) target = $region21
  $region20: #{simple_cnn_forward.1} parent=0 // pred_region
    _
  $region21: #{simple_cnn_forward.1} parent=0 // pred_fallthru
    _
  %v21 = vld [vmem:[%s1] sm:$0xf]
  %v22 = vld [vmem:[%s1 + $0x4] sm:$0xf]
  %v23 = vld [vmem:[%s1 + $0x8] sm:$0xf]
  %v24 = vld [vmem:[%s1 + $0xc] sm:$0xf]
  %v25 = vld [vmem:[%s0] sm:$0xff]
  %v26 = vld [vmem:[%s0 + $0x8] sm:$0xff]
  %v27 = vld [vmem:[%s0 + $0x10] sm:$0xff]
  %v28 = vld [vmem:[%s0 + $0x18] sm:$0xff]
  %v29 = vld [vmem:[%s0 + $0x20] sm:$0xff]
  %v30 = vld [vmem:[%s0 + $0x28] sm:$0xff]
  %v31 = vld [vmem:[%s0 + $0x30] sm:$0x33]
  %v32 = vld [vmem:[%s0 + $0x38] sm:$0x33]
  %v33 = vld [vmem:[%s4] sm:$0xff]
  %v34 = vld [vmem:[%s4 + $0x8] sm:$0xff]
  %v35 = vld [vmem:[%s4 + $0x10] sm:$0xff]
  %v36 = vld [vmem:[%s4 + $0x18] sm:$0xff]
  %38 = vset.pattern.permute.xlu0 0
  %39 = vperm.xlu0 %38, %v33
  %v40 = vpop.permute.xlu0 %39
  %43 = vset.pattern.permute.xlu0 0
  %44 = vperm.xlu0 %43, %v34
  %v45 = vpop.permute.xlu0 %44
  %48 = vset.pattern.permute.xlu0 0
  %49 = vperm.xlu0 %48, %v35
  %v50 = vpop.permute.xlu0 %49
  %53 = vset.pattern.permute.xlu0 0
  %54 = vperm.xlu0 %53, %v36
  %v55 = vpop.permute.xlu0 %54
  %v61 = vunpack.c.l.b16 %v21
  %v62 = vunpack.c.l.b16 %v22
  %v63 = vunpack.c.l.b16 %v23
  %v64 = vunpack.c.l.b16 %v24
  %v65 = vpack.c.b16 %v62, %v61
  %v66 = vpack.c.b16 %v64, %v63
  %v75 = vunpack.c.l.b16 %v25
  %v76 = vunpack.c.h.b16 %v25
  %v77 = vunpack.c.l.b16 %v26
  %v78 = vunpack.c.h.b16 %v26
  %v79 = vunpack.c.l.b16 %v27
  %v80 = vunpack.c.h.b16 %v27
  %v81 = vunpack.c.l.b16 %v28
  %v82 = vunpack.c.h.b16 %v28
  %v83 = vunpack.c.l.b16 %v29
  %v84 = vunpack.c.h.b16 %v29
  %v85 = vunpack.c.l.b16 %v30
  %v86 = vunpack.c.h.b16 %v30
  %v87 = vunpack.c.l.b16 %v31
  %v88 = vunpack.c.h.b16 %v31
  %v89 = vunpack.c.l.b16 %v32
  %v90 = vunpack.c.h.b16 %v32
  %v91 = vpack.c.b16 %v79, %v75
  %v92 = vpack.c.b16 %v80, %v76
  %v93 = vpack.c.b16 %v81, %v77
  %v94 = vpack.c.b16 %v82, %v78
  %v95 = vpack.c.b16 %v87, %v83
  %v96 = vpack.c.b16 %v88, %v84
  %v97 = vpack.c.b16 %v89, %v85
  %v98 = vpack.c.b16 %v90, %v86
  %vm103 = vcmask 220160
  %v105 = vsel %vm103, %v65, 0
  %v108 = vsel %vm103, %v66, 0
  %vm110 = vcmask 1044480
  %vm111 = vcmask 1045504
  %v112 = vsel %vm110, 4294967295, 65535
  %v113 = vsel %vm111, %v112, 0
  %v115 = vand.u32 %v95, %v113
  %v118 = vand.u32 %v96, %v113
  %v121 = vand.u32 %v97, %v113
  %v124 = vand.u32 %v98, %v113
  %126 = vmatprep.subr.bf16.mxu0 %v92
  %127 = vmatpush1.bf16.msra.mxu0 %v91
  %128 = vmatprep.subr.bf16.mxu0 %v118
  %129 = vmatpush1.bf16.msra.mxu0 %v115
  %130 = vmatprep.subr.bf16.mxu0 0
  %131 = vmatpush1.bf16.msra.mxu0 0
  %132 = vmatprep.subr.bf16.mxu0 0
  %133 = vmatpush1.bf16.msra.mxu0 0
  %134 = vmatprep.subr.bf16.mxu0 0
  %135 = vmatpush1.bf16.msra.mxu0 0
  %136 = vmatprep.subr.bf16.mxu0 0
  %137 = vmatpush1.bf16.msra.mxu0 0
  %138 = vmatprep.subr.bf16.mxu0 0
  %139 = vmatpush1.bf16.msra.mxu0 0
  %140 = vmatprep.subr.bf16.mxu0 0
  %141 = vmatpush1.bf16.msra.mxu0 0
  %142 = vmatprep.subr.bf16.mxu0 0
  %143 = vmatpush1.bf16.msra.mxu0 0
  %144 = vmatprep.subr.bf16.mxu0 0
  %145 = vmatpush1.bf16.msra.mxu0 0
  %146 = vmatprep.subr.bf16.mxu0 0
  %147 = vmatpush1.bf16.msra.mxu0 0
  %148 = vmatprep.subr.bf16.mxu0 0
  %149 = vmatpush1.bf16.msra.mxu0 0
  %150 = vmatprep.subr.bf16.mxu0 0
  %151 = vmatpush1.bf16.msra.mxu0 0
  %152 = vmatprep.subr.bf16.mxu0 0
  %153 = vmatpush1.bf16.msra.mxu0 0
  %154 = vmatprep.subr.bf16.mxu0 0
  %155 = vmatpush1.bf16.msra.mxu0 0
  %156 = vmatprep.subr.bf16.mxu0 0
  %157 = vmatpush1.bf16.msra.mxu0 0
  %158 = vmatprep.mubr.bf16.mxu0 0
  %159 = vmatmul.mubr.bf16.gmra.mrb[0].mxu0 %v105
  %v160 = vpop.f32.mrb[0].mxu0
  %v161 = vadd.f32 %v40, %v160
  %v162 = vpop.f32.mrb[0].mxu0
  %v163 = vadd.f32 %v40, %v162
  %v164 = vpop.f32.mrb[0].mxu0
  %v165 = vadd.f32 %v45, %v164
  %v166 = vpop.f32.mrb[0].mxu0
  %v167 = vadd.f32 %v45, %v166
  %168 = vmatprep.mubr.bf16.mxu0 0
  %169 = vmatmul.mubr.bf16.gmra.mrb[0].mxu0 %v108
  %v170 = vpop.f32.mrb[0].mxu0
  %v171 = vadd.f32 %v50, %v170
  %v172 = vpop.f32.mrb[0].mxu0
  %v173 = vadd.f32 %v50, %v172
  %v174 = vpop.f32.mrb[0].mxu0
  %v175 = vadd.f32 %v55, %v174
  %v176 = vpop.f32.mrb[0].mxu0
  %v177 = vadd.f32 %v55, %v176
  %178 = vdwg.mxu0
  %179 = vmatprep.subr.bf16.mxu0 %v94
  %180 = vmatpush1.bf16.msra.mxu0 %v93
  %181 = vmatprep.subr.bf16.mxu0 %v124
  %182 = vmatpush1.bf16.msra.mxu0 %v121
  %183 = vmatprep.subr.bf16.mxu0 0
  %184 = vmatpush1.bf16.msra.mxu0 0
  %185 = vmatprep.subr.bf16.mxu0 0
  %186 = vmatpush1.bf16.msra.mxu0 0
  %187 = vmatprep.subr.bf16.mxu0 0
  %188 = vmatpush1.bf16.msra.mxu0 0
  %189 = vmatprep.subr.bf16.mxu0 0
  %190 = vmatpush1.bf16.msra.mxu0 0
  %191 = vmatprep.subr.bf16.mxu0 0
  %192 = vmatpush1.bf16.msra.mxu0 0
  %193 = vmatprep.subr.bf16.mxu0 0
  %194 = vmatpush1.bf16.msra.mxu0 0
  %195 = vmatprep.subr.bf16.mxu0 0
  %196 = vmatpush1.bf16.msra.mxu0 0
  %197 = vmatprep.subr.bf16.mxu0 0
  %198 = vmatpush1.bf16.msra.mxu0 0
  %199 = vmatprep.subr.bf16.mxu0 0
  %200 = vmatpush1.bf16.msra.mxu0 0
  %201 = vmatprep.subr.bf16.mxu0 0
  %202 = vmatpush1.bf16.msra.mxu0 0
  %203 = vmatprep.subr.bf16.mxu0 0
  %204 = vmatpush1.bf16.msra.mxu0 0
  %205 = vmatprep.subr.bf16.mxu0 0
  %206 = vmatpush1.bf16.msra.mxu0 0
  %207 = vmatprep.subr.bf16.mxu0 0
  %208 = vmatpush1.bf16.msra.mxu0 0
  %209 = vmatprep.subr.bf16.mxu0 0
  %210 = vmatpush1.bf16.msra.mxu0 0
  %211 = vmatprep.mubr.bf16.mxu0 0
  %212 = vmatmul.mubr.bf16.gmra.mrb[0].mxu0 %v105
  %v213 = vpop.f32.mrb[0].mxu0
  %v214 = vadd.f32 %v40, %v213
  %v215 = vpop.f32.mrb[0].mxu0
  %v216 = vadd.f32 %v40, %v215
  %v217 = vpop.f32.mrb[0].mxu0
  %v218 = vadd.f32 %v45, %v217
  %v219 = vpop.f32.mrb[0].mxu0
  %v220 = vadd.f32 %v45, %v219
  %221 = vmatprep.mubr.bf16.mxu0 0
  %222 = vmatmul.mubr.bf16.gmra.mrb[0].mxu0 %v108
  %v223 = vpop.f32.mrb[0].mxu0
  %v224 = vadd.f32 %v50, %v223
  %v225 = vpop.f32.mrb[0].mxu0
  %v226 = vadd.f32 %v50, %v225
  %v227 = vpop.f32.mrb[0].mxu0
  %v228 = vadd.f32 %v55, %v227
  %v229 = vpop.f32.mrb[0].mxu0
  %v230 = vadd.f32 %v55, %v229
  %231 = vdwg.mxu0
  %v232 = vadd.f32 %v161, %v163
  %v233 = vadd.f32 %v232, %v214
  %v234 = vadd.f32 %v233, %v216
  %235 = vadd.xlane.f32.xlu0 %v234
  %v236 = vpop.xlane.xlu0 %235
  %v237 = vadd.f32 %v165, %v167
  %v238 = vadd.f32 %v237, %v218
  %v239 = vadd.f32 %v238, %v220
  %240 = vadd.xlane.f32.xlu0 %v239
  %v241 = vpop.xlane.xlu0 %240
  %v242 = vadd.f32 %v171, %v173
  %v243 = vadd.f32 %v242, %v224
  %v244 = vadd.f32 %v243, %v226
  %245 = vadd.xlane.f32.xlu0 %v244
  %v246 = vpop.xlane.xlu0 %245
  %v247 = vadd.f32 %v175, %v177
  %v248 = vadd.f32 %v247, %v228
  %v249 = vadd.f32 %v248, %v230
  %250 = vadd.xlane.f32.xlu0 %v249
  %v251 = vpop.xlane.xlu0 %250
  %v252 = vmul.f32 %v236, 0.001953125
  %v253 = vmul.f32 %v241, 0.001953125
  %v254 = vmul.f32 %v246, 0.001953125
  %v255 = vmul.f32 %v251, 0.001953125
  %v256 = vsub.f32 %v161, %v252
  %v257 = vsub.f32 %v163, %v252
  %v258 = vsub.f32 %v214, %v252
  %v259 = vsub.f32 %v216, %v252
  %v260 = vsub.f32 %v165, %v253
  %v261 = vsub.f32 %v167, %v253
  %v262 = vsub.f32 %v218, %v253
  %v263 = vsub.f32 %v220, %v253
  %v264 = vsub.f32 %v171, %v254
  %v265 = vsub.f32 %v173, %v254
  %v266 = vsub.f32 %v224, %v254
  %v267 = vsub.f32 %v226, %v254
  %v268 = vsub.f32 %v175, %v255
  %v269 = vsub.f32 %v177, %v255
  %v270 = vsub.f32 %v228, %v255
  %v271 = vsub.f32 %v230, %v255
  %v272 = vmul.f32 %v256, %v256
  %v273 = vmul.f32 %v257, %v257
  %v274 = vmul.f32 %v258, %v258
  %v275 = vmul.f32 %v259, %v259
  %v276 = vmul.f32 %v260, %v260
  %v277 = vmul.f32 %v261, %v261
  %v278 = vmul.f32 %v262, %v262
  %v279 = vmul.f32 %v263, %v263
  %v280 = vmul.f32 %v264, %v264
  %v281 = vmul.f32 %v265, %v265
  %v282 = vmul.f32 %v266, %v266
  %v283 = vmul.f32 %v267, %v267
  %v284 = vmul.f32 %v268, %v268
  %v285 = vmul.f32 %v269, %v269
  %v286 = vmul.f32 %v270, %v270
  %v287 = vmul.f32 %v271, %v271
  %v288 = vadd.f32 %v272, %v273
  %v289 = vadd.f32 %v288, %v274
  %v290 = vadd.f32 %v289, %v275
  %291 = vadd.xlane.f32.xlu0 %v290
  %v292 = vpop.xlane.xlu0 %291
  %v293 = vadd.f32 %v276, %v277
  %v294 = vadd.f32 %v293, %v278
  %v295 = vadd.f32 %v294, %v279
  %296 = vadd.xlane.f32.xlu0 %v295
  %v297 = vpop.xlane.xlu0 %296
  %v298 = vadd.f32 %v280, %v281
  %v299 = vadd.f32 %v298, %v282
  %v300 = vadd.f32 %v299, %v283
  %301 = vadd.xlane.f32.xlu0 %v300
  %v302 = vpop.xlane.xlu0 %301
  %v303 = vadd.f32 %v284, %v285
  %v304 = vadd.f32 %v303, %v286
  %v305 = vadd.f32 %v304, %v287
  %306 = vadd.xlane.f32.xlu0 %v305
  %v307 = vpop.xlane.xlu0 %306
  %v308 = vmul.f32 %v292, 0.001953125
  %v309 = vmul.f32 %v297, 0.001953125
  %v310 = vmul.f32 %v302, 0.001953125
  %v311 = vmul.f32 %v307, 0.001953125
  %v312 = vadd.f32 %v308, 1e-05
  %v313 = vadd.f32 %v309, 1e-05
  %v314 = vadd.f32 %v310, 1e-05
  %v315 = vadd.f32 %v311, 1e-05
  %v316 = vrsqrt.pop %v312
  %v317 = vrsqrt.pop %v313
  %v318 = vrsqrt.pop %v314
  %v319 = vrsqrt.pop %v315
  %v320 = vmul.f32 %v33, %v316
  %v321 = vmul.f32 %v34, %v317
  %v322 = vmul.f32 %v35, %v318
  %v323 = vmul.f32 %v36, %v319
  %325 = vset.pattern.permute.xlu0 1
  %326 = vperm.xlu0 %325, %v320
  %v327 = vpop.permute.xlu0 %326
  %330 = vset.pattern.permute.xlu0 1
  %331 = vperm.xlu0 %330, %v321
  %v332 = vpop.permute.xlu0 %331
  %335 = vset.pattern.permute.xlu0 1
  %336 = vperm.xlu0 %335, %v322
  %v337 = vpop.permute.xlu0 %336
  %340 = vset.pattern.permute.xlu0 1
  %341 = vperm.xlu0 %340, %v323
  %v342 = vpop.permute.xlu0 %341
  %v344 = vmul.f32 %v256, %v327
  %v345 = vmul.f32 %v257, %v327
  %v346 = vmul.f32 %v258, %v327
  %v347 = vmul.f32 %v259, %v327
  %v348 = vmul.f32 %v260, %v332
  %v349 = vmul.f32 %v261, %v332
  %v350 = vmul.f32 %v262, %v332
  %v351 = vmul.f32 %v263, %v332
  %v352 = vmul.f32 %v264, %v337
  %v353 = vmul.f32 %v265, %v337
  %v354 = vmul.f32 %v266, %v337
  %v355 = vmul.f32 %v267, %v337
  %v356 = vmul.f32 %v268, %v342
  %v357 = vmul.f32 %v269, %v342
  %v358 = vmul.f32 %v270, %v342
  %v359 = vmul.f32 %v271, %v342
  %360 = vset.pattern.permute.xlu0 2
  %361 = vperm.xlu0 %360, %v33
  %v362 = vpop.permute.xlu0 %361
  %364 = vset.pattern.permute.xlu0 2
  %365 = vperm.xlu0 %364, %v34
  %v366 = vpop.permute.xlu0 %365
  %368 = vset.pattern.permute.xlu0 2
  %369 = vperm.xlu0 %368, %v35
  %v370 = vpop.permute.xlu0 %369
  %372 = vset.pattern.permute.xlu0 2
  %373 = vperm.xlu0 %372, %v36
  %v374 = vpop.permute.xlu0 %373
  %v376 = vadd.f32 %v344, %v362
  %v377 = vadd.f32 %v345, %v362
  %v378 = vadd.f32 %v346, %v362
  %v379 = vadd.f32 %v347, %v362
  %v380 = vadd.f32 %v348, %v366
  %v381 = vadd.f32 %v349, %v366
  %v382 = vadd.f32 %v350, %v366
  %v383 = vadd.f32 %v351, %v366
  %v384 = vadd.f32 %v352, %v370
  %v385 = vadd.f32 %v353, %v370
  %v386 = vadd.f32 %v354, %v370
  %v387 = vadd.f32 %v355, %v370
  %v388 = vadd.f32 %v356, %v374
  %v389 = vadd.f32 %v357, %v374
  %v390 = vadd.f32 %v358, %v374
  %v391 = vadd.f32 %v359, %v374
  %v392 = vmax.f32 %v376, 0.0
  %v393 = vmax.f32 %v377, 0.0
  %v394 = vmax.f32 %v378, 0.0
  %v395 = vmax.f32 %v379, 0.0
  %v396 = vmax.f32 %v380, 0.0
  %v397 = vmax.f32 %v381, 0.0
  %v398 = vmax.f32 %v382, 0.0
  %v399 = vmax.f32 %v383, 0.0
  %v400 = vmax.f32 %v384, 0.0
  %v401 = vmax.f32 %v385, 0.0
  %v402 = vmax.f32 %v386, 0.0
  %v403 = vmax.f32 %v387, 0.0
  %v404 = vmax.f32 %v388, 0.0
  %v405 = vmax.f32 %v389, 0.0
  %v406 = vmax.f32 %v390, 0.0
  %v407 = vmax.f32 %v391, 0.0
  %408 = vrot.lane.b32.xlu0 %v392, 17
  %v409 = vpop.permute.xlu0 %408
  %410 = vrot.lane.b32.xlu0 %v396, 17
  %v411 = vpop.permute.xlu0 %410
  %412 = vrot.lane.b32.xlu0 %v400, 17
  %v413 = vpop.permute.xlu0 %412
  %414 = vrot.lane.b32.xlu0 %v404, 17
  %v415 = vpop.permute.xlu0 %414
  %416 = vrot.lane.b32.xlu0 %v393, 17
  %v417 = vpop.permute.xlu0 %416
  %418 = vrot.lane.b32.xlu0 %v397, 17
  %v419 = vpop.permute.xlu0 %418
  %420 = vrot.lane.b32.xlu0 %v401, 17
  %v421 = vpop.permute.xlu0 %420
  %422 = vrot.lane.b32.xlu0 %v405, 17
  %v423 = vpop.permute.xlu0 %422
  %424 = vrot.lane.b32.xlu0 %v394, 17
  %v425 = vpop.permute.xlu0 %424
  %426 = vrot.lane.b32.xlu0 %v398, 17
  %v427 = vpop.permute.xlu0 %426
  %428 = vrot.lane.b32.xlu0 %v402, 17
  %v429 = vpop.permute.xlu0 %428
  %430 = vrot.lane.b32.xlu0 %v406, 17
  %v431 = vpop.permute.xlu0 %430
  %432 = vrot.lane.b32.xlu0 %v395, 17
  %v433 = vpop.permute.xlu0 %432
  %434 = vrot.lane.b32.xlu0 %v399, 17
  %v435 = vpop.permute.xlu0 %434
  %436 = vrot.lane.b32.xlu0 %v403, 17
  %v437 = vpop.permute.xlu0 %436
  %438 = vrot.lane.b32.xlu0 %v407, 17
  %v439 = vpop.permute.xlu0 %438
  %v440 = vlaneseq
  %v441 = vand.u32 %v440, 127
  %vm442 = vcmp.lt.s32.totalorder %v441, 17
  %v443 = vsel %vm442, %v425, %v433
  %v444 = vsel %vm442, %v427, %v435
  %v445 = vsel %vm442, %v429, %v437
  %v446 = vsel %vm442, %v431, %v439
  %v447 = vsel %vm442, %v417, %v425
  %v448 = vsel %vm442, %v419, %v427
  %v449 = vsel %vm442, %v421, %v429
  %v450 = vsel %vm442, %v423, %v431
  %v451 = vsel %vm442, %v409, %v417
  %v452 = vsel %vm442, %v411, %v419
  %v453 = vsel %vm442, %v413, %v421
  %v454 = vsel %vm442, %v415, %v423
  %v455 = vsel %vm442, %v433, %v409
  %v456 = vsel %vm442, %v435, %v411
  %v457 = vsel %vm442, %v437, %v413
  %v458 = vsel %vm442, %v439, %v415
  %v459 = vld [vmem:[%s3] ss:$8 sm:$0xf]
  %v461 = vlaneseq
  %v462 = vshrl.u32 %v461, 7
  %v463 = vsub.s32 0, %v462
  %v464 = vrot.slane %v459, %v463
  %v465 = vlaneseq
  %v466 = vshrl.u32 %v465, 7
  %v467 = vsub.s32 1, %v466
  %v468 = vrot.slane %v459, %v467
  %v469 = vlaneseq
  %v470 = vshrl.u32 %v469, 7
  %v471 = vsub.s32 2, %v470
  %v472 = vrot.slane %v459, %v471
  %v473 = vlaneseq
  %v474 = vshrl.u32 %v473, 7
  %v475 = vsub.s32 3, %v474
  %v476 = vrot.slane %v459, %v475
  %v481 = vmul.f32 %v455, %v464
  %v482 = vmul.f32 %v451, %v468
  %v483 = vmul.f32 %v447, %v472
  %v484 = vmul.f32 %v443, %v476
  %v485 = vmul.f32 %v456, %v464
  %v486 = vmul.f32 %v452, %v468
  %v487 = vmul.f32 %v448, %v472
  %v488 = vmul.f32 %v444, %v476
  %v489 = vmul.f32 %v457, %v464
  %v490 = vmul.f32 %v453, %v468
  %v491 = vmul.f32 %v449, %v472
  %v492 = vmul.f32 %v445, %v476
  %v493 = vmul.f32 %v458, %v464
  %v494 = vmul.f32 %v454, %v468
  %v495 = vmul.f32 %v450, %v472
  %v496 = vmul.f32 %v446, %v476
  %v497 = vpack.c.bf16 %v485, %v481
  %v498 = vpack.c.bf16 %v486, %v482
  %v499 = vpack.c.bf16 %v487, %v483
  %v500 = vpack.c.bf16 %v488, %v484
  %v501 = vpack.c.bf16 %v493, %v489
  %v502 = vpack.c.bf16 %v494, %v490
  %v503 = vpack.c.bf16 %v495, %v491
  %v504 = vpack.c.bf16 %v496, %v492
  %505 = vst [vmem:[#allocation2] sm:$0xff] %v497
  %506 = vst [vmem:[#allocation2 + $0x8] sm:$0xff] %v498
  %507 = vst [vmem:[#allocation2 + $0x10] sm:$0xff] %v499
  %508 = vst [vmem:[#allocation2 + $0x18] sm:$0xff] %v500
  %509 = vst [vmem:[#allocation2 + $0x20] sm:$0xff] %v501
  %510 = vst [vmem:[#allocation2 + $0x28] sm:$0xff] %v502
  %511 = vst [vmem:[#allocation2 + $0x30] sm:$0xff] %v503
  %512 = vst [vmem:[#allocation2 + $0x38] sm:$0xff] %v504
  %513 = vrot.lane.b32.xlu0 %v392, 16
  %v514 = vpop.permute.xlu0 %513
  %515 = vrot.lane.b32.xlu0 %v396, 16
  %v516 = vpop.permute.xlu0 %515
  %517 = vrot.lane.b32.xlu0 %v400, 16
  %v518 = vpop.permute.xlu0 %517
  %519 = vrot.lane.b32.xlu0 %v404, 16
  %v520 = vpop.permute.xlu0 %519
  %521 = vrot.lane.b32.xlu0 %v393, 16
  %v522 = vpop.permute.xlu0 %521
  %523 = vrot.lane.b32.xlu0 %v397, 16
  %v524 = vpop.permute.xlu0 %523
  %525 = vrot.lane.b32.xlu0 %v401, 16
  %v526 = vpop.permute.xlu0 %525
  %527 = vrot.lane.b32.xlu0 %v405, 16
  %v528 = vpop.permute.xlu0 %527
  %529 = vrot.lane.b32.xlu0 %v394, 16
  %v530 = vpop.permute.xlu0 %529
  %531 = vrot.lane.b32.xlu0 %v398, 16
  %v532 = vpop.permute.xlu0 %531
  %533 = vrot.lane.b32.xlu0 %v402, 16
  %v534 = vpop.permute.xlu0 %533
  %535 = vrot.lane.b32.xlu0 %v406, 16
  %v536 = vpop.permute.xlu0 %535
  %537 = vrot.lane.b32.xlu0 %v395, 16
  %v538 = vpop.permute.xlu0 %537
  %539 = vrot.lane.b32.xlu0 %v399, 16
  %v540 = vpop.permute.xlu0 %539
  %541 = vrot.lane.b32.xlu0 %v403, 16
  %v542 = vpop.permute.xlu0 %541
  %543 = vrot.lane.b32.xlu0 %v407, 16
  %v544 = vpop.permute.xlu0 %543
  %vm545 = vcmp.lt.s32.totalorder %v441, 16
  %v546 = vsel %vm545, %v530, %v538
  %v547 = vsel %vm545, %v532, %v540
  %v548 = vsel %vm545, %v534, %v542
  %v549 = vsel %vm545, %v536, %v544
  %v550 = vsel %vm545, %v522, %v530
  %v551 = vsel %vm545, %v524, %v532
  %v552 = vsel %vm545, %v526, %v534
  %v553 = vsel %vm545, %v528, %v536
  %v554 = vsel %vm545, %v514, %v522
  %v555 = vsel %vm545, %v516, %v524
  %v556 = vsel %vm545, %v518, %v526
  %v557 = vsel %vm545, %v520, %v528
  %v558 = vsel %vm545, %v538, %v514
  %v559 = vsel %vm545, %v540, %v516
  %v560 = vsel %vm545, %v542, %v518
  %v561 = vsel %vm545, %v544, %v520
  %s562 = scalar_lea.vmem %s3, 1
  %v563 = vld [vmem:[%s562] ss:$8 sm:$0xf]
  %v565 = vlaneseq
  %v566 = vshrl.u32 %v565, 7
  %v567 = vsub.s32 0, %v566
  %v568 = vrot.slane %v563, %v567
  %v569 = vlaneseq
  %v570 = vshrl.u32 %v569, 7
  %v571 = vsub.s32 1, %v570
  %v572 = vrot.slane %v563, %v571
  %v573 = vlaneseq
  %v574 = vshrl.u32 %v573, 7
  %v575 = vsub.s32 2, %v574
  %v576 = vrot.slane %v563, %v575
  %v577 = vlaneseq
  %v578 = vshrl.u32 %v577, 7
  %v579 = vsub.s32 3, %v578
  %v580 = vrot.slane %v563, %v579
  %v585 = vmul.f32 %v558, %v568
  %v586 = vmul.f32 %v554, %v572
  %v587 = vmul.f32 %v550, %v576
  %v588 = vmul.f32 %v546, %v580
  %v589 = vmul.f32 %v559, %v568
  %v590 = vmul.f32 %v555, %v572
  %v591 = vmul.f32 %v551, %v576
  %v592 = vmul.f32 %v547, %v580
  %v593 = vmul.f32 %v560, %v568
  %v594 = vmul.f32 %v556, %v572
  %v595 = vmul.f32 %v552, %v576
  %v596 = vmul.f32 %v548, %v580
  %v597 = vmul.f32 %v561, %v568
  %v598 = vmul.f32 %v557, %v572
  %v599 = vmul.f32 %v553, %v576
  %v600 = vmul.f32 %v549, %v580
  %v601 = vpack.c.bf16 %v589, %v585
  %v602 = vpack.c.bf16 %v590, %v586
  %v603 = vpack.c.bf16 %v591, %v587
  %v604 = vpack.c.bf16 %v592, %v588
  %v605 = vpack.c.bf16 %v597, %v593
  %v606 = vpack.c.bf16 %v598, %v594
  %v607 = vpack.c.bf16 %v599, %v595
  %v608 = vpack.c.bf16 %v600, %v596
  %609 = vst [vmem:[#allocation2 + $0x40] sm:$0xff] %v601
  %610 = vst [vmem:[#allocation2 + $0x48] sm:$0xff] %v602
  %611 = vst [vmem:[#allocation2 + $0x50] sm:$0xff] %v603
  %612 = vst [vmem:[#allocation2 + $0x58] sm:$0xff] %v604
  %613 = vst [vmem:[#allocation2 + $0x60] sm:$0xff] %v605
  %614 = vst [vmem:[#allocation2 + $0x68] sm:$0xff] %v606
  %615 = vst [vmem:[#allocation2 + $0x70] sm:$0xff] %v607
  %616 = vst [vmem:[#allocation2 + $0x78] sm:$0xff] %v608
  %617 = vrot.lane.b32.xlu0 %v392, 15
  %v618 = vpop.permute.xlu0 %617
  %619 = vrot.lane.b32.xlu0 %v396, 15
  %v620 = vpop.permute.xlu0 %619
  %621 = vrot.lane.b32.xlu0 %v400, 15
  %v622 = vpop.permute.xlu0 %621
  %623 = vrot.lane.b32.xlu0 %v404, 15
  %v624 = vpop.permute.xlu0 %623
  %625 = vrot.lane.b32.xlu0 %v393, 15
  %v626 = vpop.permute.xlu0 %625
  %627 = vrot.lane.b32.xlu0 %v397, 15
  %v628 = vpop.permute.xlu0 %627
  %629 = vrot.lane.b32.xlu0 %v401, 15
  %v630 = vpop.permute.xlu0 %629
  %631 = vrot.lane.b32.xlu0 %v405, 15
  %v632 = vpop.permute.xlu0 %631
  %633 = vrot.lane.b32.xlu0 %v394, 15
  %v634 = vpop.permute.xlu0 %633
  %635 = vrot.lane.b32.xlu0 %v398, 15
  %v636 = vpop.permute.xlu0 %635
  %637 = vrot.lane.b32.xlu0 %v402, 15
  %v638 = vpop.permute.xlu0 %637
  %639 = vrot.lane.b32.xlu0 %v406, 15
  %v640 = vpop.permute.xlu0 %639
  %641 = vrot.lane.b32.xlu0 %v395, 15
  %v642 = vpop.permute.xlu0 %641
  %643 = vrot.lane.b32.xlu0 %v399, 15
  %v644 = vpop.permute.xlu0 %643
  %645 = vrot.lane.b32.xlu0 %v403, 15
  %v646 = vpop.permute.xlu0 %645
  %647 = vrot.lane.b32.xlu0 %v407, 15
  %v648 = vpop.permute.xlu0 %647
  %vm649 = vcmp.lt.s32.totalorder %v441, 15
  %v650 = vsel %vm649, %v634, %v642
  %v651 = vsel %vm649, %v636, %v644
  %v652 = vsel %vm649, %v638, %v646
  %v653 = vsel %vm649, %v640, %v648
  %v654 = vsel %vm649, %v626, %v634
  %v655 = vsel %vm649, %v628, %v636
  %v656 = vsel %vm649, %v630, %v638
  %v657 = vsel %vm649, %v632, %v640
  %v658 = vsel %vm649, %v618, %v626
  %v659 = vsel %vm649, %v620, %v628
  %v660 = vsel %vm649, %v622, %v630
  %v661 = vsel %vm649, %v624, %v632
  %v662 = vsel %vm649, %v642, %v618
  %v663 = vsel %vm649, %v644, %v620
  %v664 = vsel %vm649, %v646, %v622
  %v665 = vsel %vm649, %v648, %v624
  %s666 = scalar_lea.vmem %s3, 2
  %v667 = vld [vmem:[%s666] ss:$8 sm:$0xf]
  %v669 = vlaneseq
  %v670 = vshrl.u32 %v669, 7
  %v671 = vsub.s32 0, %v670
  %v672 = vrot.slane %v667, %v671
  %v673 = vlaneseq
  %v674 = vshrl.u32 %v673, 7
  %v675 = vsub.s32 1, %v674
  %v676 = vrot.slane %v667, %v675
  %v677 = vlaneseq
  %v678 = vshrl.u32 %v677, 7
  %v679 = vsub.s32 2, %v678
  %v680 = vrot.slane %v667, %v679
  %v681 = vlaneseq
  %v682 = vshrl.u32 %v681, 7
  %v683 = vsub.s32 3, %v682
  %v684 = vrot.slane %v667, %v683
  %v689 = vmul.f32 %v662, %v672
  %v690 = vmul.f32 %v658, %v676
  %v691 = vmul.f32 %v654, %v680
  %v692 = vmul.f32 %v650, %v684
  %v693 = vmul.f32 %v663, %v672
  %v694 = vmul.f32 %v659, %v676
  %v695 = vmul.f32 %v655, %v680
  %v696 = vmul.f32 %v651, %v684
  %v697 = vmul.f32 %v664, %v672
  %v698 = vmul.f32 %v660, %v676
  %v699 = vmul.f32 %v656, %v680
  %v700 = vmul.f32 %v652, %v684
  %v701 = vmul.f32 %v665, %v672
  %v702 = vmul.f32 %v661, %v676
  %v703 = vmul.f32 %v657, %v680
  %v704 = vmul.f32 %v653, %v684
  %v705 = vpack.c.bf16 %v693, %v689
  %v706 = vpack.c.bf16 %v694, %v690
  %v707 = vpack.c.bf16 %v695, %v691
  %v708 = vpack.c.bf16 %v696, %v692
  %v709 = vpack.c.bf16 %v701, %v697
  %v710 = vpack.c.bf16 %v702, %v698
  %v711 = vpack.c.bf16 %v703, %v699
  %v712 = vpack.c.bf16 %v704, %v700
  %713 = vst [vmem:[#allocation2 + $0x80] sm:$0xff] %v705
  %714 = vst [vmem:[#allocation2 + $0x88] sm:$0xff] %v706
  %715 = vst [vmem:[#allocation2 + $0x90] sm:$0xff] %v707
  %716 = vst [vmem:[#allocation2 + $0x98] sm:$0xff] %v708
  %717 = vst [vmem:[#allocation2 + $0xa0] sm:$0xff] %v709
  %718 = vst [vmem:[#allocation2 + $0xa8] sm:$0xff] %v710
  %719 = vst [vmem:[#allocation2 + $0xb0] sm:$0xff] %v711
  %720 = vst [vmem:[#allocation2 + $0xb8] sm:$0xff] %v712
  %721 = vrot.lane.b32.xlu0 %v392, 1
  %v722 = vpop.permute.xlu0 %721
  %723 = vrot.lane.b32.xlu0 %v396, 1
  %v724 = vpop.permute.xlu0 %723
  %725 = vrot.lane.b32.xlu0 %v400, 1
  %v726 = vpop.permute.xlu0 %725
  %727 = vrot.lane.b32.xlu0 %v404, 1
  %v728 = vpop.permute.xlu0 %727
  %729 = vrot.lane.b32.xlu0 %v393, 1
  %v730 = vpop.permute.xlu0 %729
  %731 = vrot.lane.b32.xlu0 %v397, 1
  %v732 = vpop.permute.xlu0 %731
  %733 = vrot.lane.b32.xlu0 %v401, 1
  %v734 = vpop.permute.xlu0 %733
  %735 = vrot.lane.b32.xlu0 %v405, 1
  %v736 = vpop.permute.xlu0 %735
  %737 = vrot.lane.b32.xlu0 %v394, 1
  %v738 = vpop.permute.xlu0 %737
  %739 = vrot.lane.b32.xlu0 %v398, 1
  %v740 = vpop.permute.xlu0 %739
  %741 = vrot.lane.b32.xlu0 %v402, 1
  %v742 = vpop.permute.xlu0 %741
  %743 = vrot.lane.b32.xlu0 %v406, 1
  %v744 = vpop.permute.xlu0 %743
  %745 = vrot.lane.b32.xlu0 %v395, 1
  %v746 = vpop.permute.xlu0 %745
  %747 = vrot.lane.b32.xlu0 %v399, 1
  %v748 = vpop.permute.xlu0 %747
  %749 = vrot.lane.b32.xlu0 %v403, 1
  %v750 = vpop.permute.xlu0 %749
  %751 = vrot.lane.b32.xlu0 %v407, 1
  %v752 = vpop.permute.xlu0 %751
  %vm753 = vcmp.lt.s32.totalorder %v441, 1
  %v754 = vsel %vm753, %v738, %v746
  %v755 = vsel %vm753, %v740, %v748
  %v756 = vsel %vm753, %v742, %v750
  %v757 = vsel %vm753, %v744, %v752
  %v758 = vsel %vm753, %v730, %v738
  %v759 = vsel %vm753, %v732, %v740
  %v760 = vsel %vm753, %v734, %v742
  %v761 = vsel %vm753, %v736, %v744
  %v762 = vsel %vm753, %v722, %v730
  %v763 = vsel %vm753, %v724, %v732
  %v764 = vsel %vm753, %v726, %v734
  %v765 = vsel %vm753, %v728, %v736
  %v766 = vsel %vm753, %v746, %v722
  %v767 = vsel %vm753, %v748, %v724
  %v768 = vsel %vm753, %v750, %v726
  %v769 = vsel %vm753, %v752, %v728
  %s770 = scalar_lea.vmem %s3, 3
  %v771 = vld [vmem:[%s770] ss:$8 sm:$0xf]
  %v773 = vlaneseq
  %v774 = vshrl.u32 %v773, 7
  %v775 = vsub.s32 0, %v774
  %v776 = vrot.slane %v771, %v775
  %v777 = vlaneseq
  %v778 = vshrl.u32 %v777, 7
  %v779 = vsub.s32 1, %v778
  %v780 = vrot.slane %v771, %v779
  %v781 = vlaneseq
  %v782 = vshrl.u32 %v781, 7
  %v783 = vsub.s32 2, %v782
  %v784 = vrot.slane %v771, %v783
  %v785 = vlaneseq
  %v786 = vshrl.u32 %v785, 7
  %v787 = vsub.s32 3, %v786
  %v788 = vrot.slane %v771, %v787
  %v793 = vmul.f32 %v766, %v776
  %v794 = vmul.f32 %v762, %v780
  %v795 = vmul.f32 %v758, %v784
  %v796 = vmul.f32 %v754, %v788
  %v797 = vmul.f32 %v767, %v776
  %v798 = vmul.f32 %v763, %v780
  %v799 = vmul.f32 %v759, %v784
  %v800 = vmul.f32 %v755, %v788
  %v801 = vmul.f32 %v768, %v776
  %v802 = vmul.f32 %v764, %v780
  %v803 = vmul.f32 %v760, %v784
  %v804 = vmul.f32 %v756, %v788
  %v805 = vmul.f32 %v769, %v776
  %v806 = vmul.f32 %v765, %v780
  %v807 = vmul.f32 %v761, %v784
  %v808 = vmul.f32 %v757, %v788
  %v809 = vpack.c.bf16 %v797, %v793
  %v810 = vpack.c.bf16 %v798, %v794
  %v811 = vpack.c.bf16 %v799, %v795
  %v812 = vpack.c.bf16 %v800, %v796
  %v813 = vpack.c.bf16 %v805, %v801
  %v814 = vpack.c.bf16 %v806, %v802
  %v815 = vpack.c.bf16 %v807, %v803
  %v816 = vpack.c.bf16 %v808, %v804
  %817 = vst [vmem:[#allocation2 + $0xc0] sm:$0xff] %v809
  %818 = vst [vmem:[#allocation2 + $0xc8] sm:$0xff] %v810
  %819 = vst [vmem:[#allocation2 + $0xd0] sm:$0xff] %v811
  %820 = vst [vmem:[#allocation2 + $0xd8] sm:$0xff] %v812
  %821 = vst [vmem:[#allocation2 + $0xe0] sm:$0xff] %v813
  %822 = vst [vmem:[#allocation2 + $0xe8] sm:$0xff] %v814
  %823 = vst [vmem:[#allocation2 + $0xf0] sm:$0xff] %v815
  %824 = vst [vmem:[#allocation2 + $0xf8] sm:$0xff] %v816
  %s825 = scalar_lea.vmem %s3, 4
  %v826 = vld [vmem:[%s825] ss:$8 sm:$0xf]
  %v828 = vlaneseq
  %v829 = vshrl.u32 %v828, 7
  %v830 = vsub.s32 0, %v829
  %v831 = vrot.slane %v826, %v830
  %v832 = vlaneseq
  %v833 = vshrl.u32 %v832, 7
  %v834 = vsub.s32 1, %v833
  %v835 = vrot.slane %v826, %v834
  %v836 = vlaneseq
  %v837 = vshrl.u32 %v836, 7
  %v838 = vsub.s32 2, %v837
  %v839 = vrot.slane %v826, %v838
  %v840 = vlaneseq
  %v841 = vshrl.u32 %v840, 7
  %v842 = vsub.s32 3, %v841
  %v843 = vrot.slane %v826, %v842
  %v848 = vmul.f32 %v392, %v831
  %v849 = vmul.f32 %v393, %v835
  %v850 = vmul.f32 %v394, %v839
  %v851 = vmul.f32 %v395, %v843
  %v852 = vmul.f32 %v396, %v831
  %v853 = vmul.f32 %v397, %v835
  %v854 = vmul.f32 %v398, %v839
  %v855 = vmul.f32 %v399, %v843
  %v856 = vmul.f32 %v400, %v831
  %v857 = vmul.f32 %v401, %v835
  %v858 = vmul.f32 %v402, %v839
  %v859 = vmul.f32 %v403, %v843
  %v860 = vmul.f32 %v404, %v831
  %v861 = vmul.f32 %v405, %v835
  %v862 = vmul.f32 %v406, %v839
  %v863 = vmul.f32 %v407, %v843
  %v864 = vpack.c.bf16 %v852, %v848
  %v865 = vpack.c.bf16 %v853, %v849
  %v866 = vpack.c.bf16 %v854, %v850
  %v867 = vpack.c.bf16 %v855, %v851
  %v868 = vpack.c.bf16 %v860, %v856
  %v869 = vpack.c.bf16 %v861, %v857
  %v870 = vpack.c.bf16 %v862, %v858
  %v871 = vpack.c.bf16 %v863, %v859
  %872 = vst [vmem:[#allocation2 + $0x100] sm:$0xff] %v864
  %873 = vst [vmem:[#allocation2 + $0x108] sm:$0xff] %v865
  %874 = vst [vmem:[#allocation2 + $0x110] sm:$0xff] %v866
  %875 = vst [vmem:[#allocation2 + $0x118] sm:$0xff] %v867
  %876 = vst [vmem:[#allocation2 + $0x120] sm:$0xff] %v868
  %877 = vst [vmem:[#allocation2 + $0x128] sm:$0xff] %v869
  %878 = vst [vmem:[#allocation2 + $0x130] sm:$0xff] %v870
  %879 = vst [vmem:[#allocation2 + $0x138] sm:$0xff] %v871
  %880 = vrot.lane.b32.xlu0 %v392, 127
  %v881 = vpop.permute.xlu0 %880
  %882 = vrot.lane.b32.xlu0 %v396, 127
  %v883 = vpop.permute.xlu0 %882
  %884 = vrot.lane.b32.xlu0 %v400, 127
  %v885 = vpop.permute.xlu0 %884
  %886 = vrot.lane.b32.xlu0 %v404, 127
  %v887 = vpop.permute.xlu0 %886
  %888 = vrot.lane.b32.xlu0 %v393, 127
  %v889 = vpop.permute.xlu0 %888
  %890 = vrot.lane.b32.xlu0 %v397, 127
  %v891 = vpop.permute.xlu0 %890
  %892 = vrot.lane.b32.xlu0 %v401, 127
  %v893 = vpop.permute.xlu0 %892
  %894 = vrot.lane.b32.xlu0 %v405, 127
  %v895 = vpop.permute.xlu0 %894
  %896 = vrot.lane.b32.xlu0 %v394, 127
  %v897 = vpop.permute.xlu0 %896
  %898 = vrot.lane.b32.xlu0 %v398, 127
  %v899 = vpop.permute.xlu0 %898
  %900 = vrot.lane.b32.xlu0 %v402, 127
  %v901 = vpop.permute.xlu0 %900
  %902 = vrot.lane.b32.xlu0 %v406, 127
  %v903 = vpop.permute.xlu0 %902
  %904 = vrot.lane.b32.xlu0 %v395, 127
  %v905 = vpop.permute.xlu0 %904
  %906 = vrot.lane.b32.xlu0 %v399, 127
  %v907 = vpop.permute.xlu0 %906
  %908 = vrot.lane.b32.xlu0 %v403, 127
  %v909 = vpop.permute.xlu0 %908
  %910 = vrot.lane.b32.xlu0 %v407, 127
  %v911 = vpop.permute.xlu0 %910
  %vm912 = vcmp.lt.s32.totalorder %v441, 127
  %v913 = vsel %vm912, %v897, %v905
  %v914 = vsel %vm912, %v899, %v907
  %v915 = vsel %vm912, %v901, %v909
  %v916 = vsel %vm912, %v903, %v911
  %v917 = vsel %vm912, %v889, %v897
  %v918 = vsel %vm912, %v891, %v899
  %v919 = vsel %vm912, %v893, %v901
  %v920 = vsel %vm912, %v895, %v903
  %v921 = vsel %vm912, %v881, %v889
  %v922 = vsel %vm912, %v883, %v891
  %v923 = vsel %vm912, %v885, %v893
  %v924 = vsel %vm912, %v887, %v895
  %v925 = vsel %vm912, %v905, %v881
  %v926 = vsel %vm912, %v907, %v883
  %v927 = vsel %vm912, %v909, %v885
  %v928 = vsel %vm912, %v911, %v887
  %s929 = scalar_lea.vmem %s3, 5
  %v930 = vld [vmem:[%s929] ss:$8 sm:$0xf]
  %v932 = vlaneseq
  %v933 = vshrl.u32 %v932, 7
  %v934 = vsub.s32 0, %v933
  %v935 = vrot.slane %v930, %v934
  %v936 = vlaneseq
  %v937 = vshrl.u32 %v936, 7
  %v938 = vsub.s32 1, %v937
  %v939 = vrot.slane %v930, %v938
  %v940 = vlaneseq
  %v941 = vshrl.u32 %v940, 7
  %v942 = vsub.s32 2, %v941
  %v943 = vrot.slane %v930, %v942
  %v944 = vlaneseq
  %v945 = vshrl.u32 %v944, 7
  %v946 = vsub.s32 3, %v945
  %v947 = vrot.slane %v930, %v946
  %v952 = vmul.f32 %v921, %v935
  %v953 = vmul.f32 %v917, %v939
  %v954 = vmul.f32 %v913, %v943
  %v955 = vmul.f32 %v925, %v947
  %v956 = vmul.f32 %v922, %v935
  %v957 = vmul.f32 %v918, %v939
  %v958 = vmul.f32 %v914, %v943
  %v959 = vmul.f32 %v926, %v947
  %v960 = vmul.f32 %v923, %v935
  %v961 = vmul.f32 %v919, %v939
  %v962 = vmul.f32 %v915, %v943
  %v963 = vmul.f32 %v927, %v947
  %v964 = vmul.f32 %v924, %v935
  %v965 = vmul.f32 %v920, %v939
  %v966 = vmul.f32 %v916, %v943
  %v967 = vmul.f32 %v928, %v947
  %v968 = vpack.c.bf16 %v956, %v952
  %v969 = vpack.c.bf16 %v957, %v953
  %v970 = vpack.c.bf16 %v958, %v954
  %v971 = vpack.c.bf16 %v959, %v955
  %v972 = vpack.c.bf16 %v964, %v960
  %v973 = vpack.c.bf16 %v965, %v961
  %v974 = vpack.c.bf16 %v966, %v962
  %v975 = vpack.c.bf16 %v967, %v963
  %976 = vst [vmem:[#allocation2 + $0x140] sm:$0xff] %v968
  %977 = vst [vmem:[#allocation2 + $0x148] sm:$0xff] %v969
  %978 = vst [vmem:[#allocation2 + $0x150] sm:$0xff] %v970
  %979 = vst [vmem:[#allocation2 + $0x158] sm:$0xff] %v971
  %980 = vst [vmem:[#allocation2 + $0x160] sm:$0xff] %v972
  %981 = vst [vmem:[#allocation2 + $0x168] sm:$0xff] %v973
  %982 = vst [vmem:[#allocation2 + $0x170] sm:$0xff] %v974
  %983 = vst [vmem:[#allocation2 + $0x178] sm:$0xff] %v975
  %984 = vrot.lane.b32.xlu0 %v392, 113
  %v985 = vpop.permute.xlu0 %984
  %986 = vrot.lane.b32.xlu0 %v396, 113
  %v987 = vpop.permute.xlu0 %986
  %988 = vrot.lane.b32.xlu0 %v400, 113
  %v989 = vpop.permute.xlu0 %988
  %990 = vrot.lane.b32.xlu0 %v404, 113
  %v991 = vpop.permute.xlu0 %990
  %992 = vrot.lane.b32.xlu0 %v393, 113
  %v993 = vpop.permute.xlu0 %992
  %994 = vrot.lane.b32.xlu0 %v397, 113
  %v995 = vpop.permute.xlu0 %994
  %996 = vrot.lane.b32.xlu0 %v401, 113
  %v997 = vpop.permute.xlu0 %996
  %998 = vrot.lane.b32.xlu0 %v405, 113
  %v999 = vpop.permute.xlu0 %998
  %1000 = vrot.lane.b32.xlu0 %v394, 113
  %v1001 = vpop.permute.xlu0 %1000
  %1002 = vrot.lane.b32.xlu0 %v398, 113
  %v1003 = vpop.permute.xlu0 %1002
  %1004 = vrot.lane.b32.xlu0 %v402, 113
  %v1005 = vpop.permute.xlu0 %1004
  %1006 = vrot.lane.b32.xlu0 %v406, 113
  %v1007 = vpop.permute.xlu0 %1006
  %1008 = vrot.lane.b32.xlu0 %v395, 113
  %v1009 = vpop.permute.xlu0 %1008
  %1010 = vrot.lane.b32.xlu0 %v399, 113
  %v1011 = vpop.permute.xlu0 %1010
  %1012 = vrot.lane.b32.xlu0 %v403, 113
  %v1013 = vpop.permute.xlu0 %1012
  %1014 = vrot.lane.b32.xlu0 %v407, 113
  %v1015 = vpop.permute.xlu0 %1014
  %vm1016 = vcmp.lt.s32.totalorder %v441, 113
  %v1017 = vsel %vm1016, %v1001, %v1009
  %v1018 = vsel %vm1016, %v1003, %v1011
  %v1019 = vsel %vm1016, %v1005, %v1013
  %v1020 = vsel %vm1016, %v1007, %v1015
  %v1021 = vsel %vm1016, %v993, %v1001
  %v1022 = vsel %vm1016, %v995, %v1003
  %v1023 = vsel %vm1016, %v997, %v1005
  %v1024 = vsel %vm1016, %v999, %v1007
  %v1025 = vsel %vm1016, %v985, %v993
  %v1026 = vsel %vm1016, %v987, %v995
  %v1027 = vsel %vm1016, %v989, %v997
  %v1028 = vsel %vm1016, %v991, %v999
  %v1029 = vsel %vm1016, %v1009, %v985
  %v1030 = vsel %vm1016, %v1011, %v987
  %v1031 = vsel %vm1016, %v1013, %v989
  %v1032 = vsel %vm1016, %v1015, %v991
  %s1033 = scalar_lea.vmem %s3, 6
  %v1034 = vld [vmem:[%s1033] ss:$8 sm:$0xf]
  %v1036 = vlaneseq
  %v1037 = vshrl.u32 %v1036, 7
  %v1038 = vsub.s32 0, %v1037
  %v1039 = vrot.slane %v1034, %v1038
  %v1040 = vlaneseq
  %v1041 = vshrl.u32 %v1040, 7
  %v1042 = vsub.s32 1, %v1041
  %v1043 = vrot.slane %v1034, %v1042
  %v1044 = vlaneseq
  %v1045 = vshrl.u32 %v1044, 7
  %v1046 = vsub.s32 2, %v1045
  %v1047 = vrot.slane %v1034, %v1046
  %v1048 = vlaneseq
  %v1049 = vshrl.u32 %v1048, 7
  %v1050 = vsub.s32 3, %v1049
  %v1051 = vrot.slane %v1034, %v1050
  %v1056 = vmul.f32 %v1025, %v1039
  %v1057 = vmul.f32 %v1021, %v1043
  %v1058 = vmul.f32 %v1017, %v1047
  %v1059 = vmul.f32 %v1029, %v1051
  %v1060 = vmul.f32 %v1026, %v1039
  %v1061 = vmul.f32 %v1022, %v1043
  %v1062 = vmul.f32 %v1018, %v1047
  %v1063 = vmul.f32 %v1030, %v1051
  %v1064 = vmul.f32 %v1027, %v1039
  %v1065 = vmul.f32 %v1023, %v1043
  %v1066 = vmul.f32 %v1019, %v1047
  %v1067 = vmul.f32 %v1031, %v1051
  %v1068 = vmul.f32 %v1028, %v1039
  %v1069 = vmul.f32 %v1024, %v1043
  %v1070 = vmul.f32 %v1020, %v1047
  %v1071 = vmul.f32 %v1032, %v1051
  %v1072 = vpack.c.bf16 %v1060, %v1056
  %v1073 = vpack.c.bf16 %v1061, %v1057
  %v1074 = vpack.c.bf16 %v1062, %v1058
  %v1075 = vpack.c.bf16 %v1063, %v1059
  %v1076 = vpack.c.bf16 %v1068, %v1064
  %v1077 = vpack.c.bf16 %v1069, %v1065
  %v1078 = vpack.c.bf16 %v1070, %v1066
  %v1079 = vpack.c.bf16 %v1071, %v1067
  %1080 = vst [vmem:[#allocation2 + $0x180] sm:$0xff] %v1072
  %1081 = vst [vmem:[#allocation2 + $0x188] sm:$0xff] %v1073
  %1082 = vst [vmem:[#allocation2 + $0x190] sm:$0xff] %v1074
  %1083 = vst [vmem:[#allocation2 + $0x198] sm:$0xff] %v1075
  %1084 = vst [vmem:[#allocation2 + $0x1a0] sm:$0xff] %v1076
  %1085 = vst [vmem:[#allocation2 + $0x1a8] sm:$0xff] %v1077
  %1086 = vst [vmem:[#allocation2 + $0x1b0] sm:$0xff] %v1078
  %1087 = vst [vmem:[#allocation2 + $0x1b8] sm:$0xff] %v1079
  %1088 = vrot.lane.b32.xlu0 %v392, 112
  %v1089 = vpop.permute.xlu0 %1088
  %1090 = vrot.lane.b32.xlu0 %v396, 112
  %v1091 = vpop.permute.xlu0 %1090
  %1092 = vrot.lane.b32.xlu0 %v400, 112
  %v1093 = vpop.permute.xlu0 %1092
  %1094 = vrot.lane.b32.xlu0 %v404, 112
  %v1095 = vpop.permute.xlu0 %1094
  %1096 = vrot.lane.b32.xlu0 %v393, 112
  %v1097 = vpop.permute.xlu0 %1096
  %1098 = vrot.lane.b32.xlu0 %v397, 112
  %v1099 = vpop.permute.xlu0 %1098
  %1100 = vrot.lane.b32.xlu0 %v401, 112
  %v1101 = vpop.permute.xlu0 %1100
  %1102 = vrot.lane.b32.xlu0 %v405, 112
  %v1103 = vpop.permute.xlu0 %1102
  %1104 = vrot.lane.b32.xlu0 %v394, 112
  %v1105 = vpop.permute.xlu0 %1104
  %1106 = vrot.lane.b32.xlu0 %v398, 112
  %v1107 = vpop.permute.xlu0 %1106
  %1108 = vrot.lane.b32.xlu0 %v402, 112
  %v1109 = vpop.permute.xlu0 %1108
  %1110 = vrot.lane.b32.xlu0 %v406, 112
  %v1111 = vpop.permute.xlu0 %1110
  %1112 = vrot.lane.b32.xlu0 %v395, 112
  %v1113 = vpop.permute.xlu0 %1112
  %1114 = vrot.lane.b32.xlu0 %v399, 112
  %v1115 = vpop.permute.xlu0 %1114
  %1116 = vrot.lane.b32.xlu0 %v403, 112
  %v1117 = vpop.permute.xlu0 %1116
  %1118 = vrot.lane.b32.xlu0 %v407, 112
  %v1119 = vpop.permute.xlu0 %1118
  %vm1120 = vcmp.lt.s32.totalorder %v441, 112
  %v1121 = vsel %vm1120, %v1105, %v1113
  %v1122 = vsel %vm1120, %v1107, %v1115
  %v1123 = vsel %vm1120, %v1109, %v1117
  %v1124 = vsel %vm1120, %v1111, %v1119
  %v1125 = vsel %vm1120, %v1097, %v1105
  %v1126 = vsel %vm1120, %v1099, %v1107
  %v1127 = vsel %vm1120, %v1101, %v1109
  %v1128 = vsel %vm1120, %v1103, %v1111
  %v1129 = vsel %vm1120, %v1089, %v1097
  %v1130 = vsel %vm1120, %v1091, %v1099
  %v1131 = vsel %vm1120, %v1093, %v1101
  %v1132 = vsel %vm1120, %v1095, %v1103
  %v1133 = vsel %vm1120, %v1113, %v1089
  %v1134 = vsel %vm1120, %v1115, %v1091
  %v1135 = vsel %vm1120, %v1117, %v1093
  %v1136 = vsel %vm1120, %v1119, %v1095
  %s1137 = scalar_lea.vmem %s3, 7
  %v1138 = vld [vmem:[%s1137] ss:$8 sm:$0xf]
  %v1140 = vlaneseq
  %v1141 = vshrl.u32 %v1140, 7
  %v1142 = vsub.s32 0, %v1141
  %v1143 = vrot.slane %v1138, %v1142
  %v1144 = vlaneseq
  %v1145 = vshrl.u32 %v1144, 7
  %v1146 = vsub.s32 1, %v1145
  %v1147 = vrot.slane %v1138, %v1146
  %v1148 = vlaneseq
  %v1149 = vshrl.u32 %v1148, 7
  %v1150 = vsub.s32 2, %v1149
  %v1151 = vrot.slane %v1138, %v1150
  %v1152 = vlaneseq
  %v1153 = vshrl.u32 %v1152, 7
  %v1154 = vsub.s32 3, %v1153
  %v1155 = vrot.slane %v1138, %v1154
  %v1160 = vmul.f32 %v1129, %v1143
  %v1161 = vmul.f32 %v1125, %v1147
  %v1162 = vmul.f32 %v1121, %v1151
  %v1163 = vmul.f32 %v1133, %v1155
  %v1164 = vmul.f32 %v1130, %v1143
  %v1165 = vmul.f32 %v1126, %v1147
  %v1166 = vmul.f32 %v1122, %v1151
  %v1167 = vmul.f32 %v1134, %v1155
  %v1168 = vmul.f32 %v1131, %v1143
  %v1169 = vmul.f32 %v1127, %v1147
  %v1170 = vmul.f32 %v1123, %v1151
  %v1171 = vmul.f32 %v1135, %v1155
  %v1172 = vmul.f32 %v1132, %v1143
  %v1173 = vmul.f32 %v1128, %v1147
  %v1174 = vmul.f32 %v1124, %v1151
  %v1175 = vmul.f32 %v1136, %v1155
  %v1176 = vpack.c.bf16 %v1164, %v1160
  %v1177 = vpack.c.bf16 %v1165, %v1161
  %v1178 = vpack.c.bf16 %v1166, %v1162
  %v1179 = vpack.c.bf16 %v1167, %v1163
  %v1180 = vpack.c.bf16 %v1172, %v1168
  %v1181 = vpack.c.bf16 %v1173, %v1169
  %v1182 = vpack.c.bf16 %v1174, %v1170
  %v1183 = vpack.c.bf16 %v1175, %v1171
  %1184 = vst [vmem:[#allocation2 + $0x1c0] sm:$0xff] %v1176
  %1185 = vst [vmem:[#allocation2 + $0x1c8] sm:$0xff] %v1177
  %1186 = vst [vmem:[#allocation2 + $0x1d0] sm:$0xff] %v1178
  %1187 = vst [vmem:[#allocation2 + $0x1d8] sm:$0xff] %v1179
  %1188 = vst [vmem:[#allocation2 + $0x1e0] sm:$0xff] %v1180
  %1189 = vst [vmem:[#allocation2 + $0x1e8] sm:$0xff] %v1181
  %1190 = vst [vmem:[#allocation2 + $0x1f0] sm:$0xff] %v1182
  %1191 = vst [vmem:[#allocation2 + $0x1f8] sm:$0xff] %v1183
  %1192 = vrot.lane.b32.xlu0 %v392, 111
  %v1193 = vpop.permute.xlu0 %1192
  %1194 = vrot.lane.b32.xlu0 %v396, 111
  %v1195 = vpop.permute.xlu0 %1194
  %1196 = vrot.lane.b32.xlu0 %v400, 111
  %v1197 = vpop.permute.xlu0 %1196
  %1198 = vrot.lane.b32.xlu0 %v404, 111
  %v1199 = vpop.permute.xlu0 %1198
  %1200 = vrot.lane.b32.xlu0 %v393, 111
  %v1201 = vpop.permute.xlu0 %1200
  %1202 = vrot.lane.b32.xlu0 %v397, 111
  %v1203 = vpop.permute.xlu0 %1202
  %1204 = vrot.lane.b32.xlu0 %v401, 111
  %v1205 = vpop.permute.xlu0 %1204
  %1206 = vrot.lane.b32.xlu0 %v405, 111
  %v1207 = vpop.permute.xlu0 %1206
  %1208 = vrot.lane.b32.xlu0 %v394, 111
  %v1209 = vpop.permute.xlu0 %1208
  %1210 = vrot.lane.b32.xlu0 %v398, 111
  %v1211 = vpop.permute.xlu0 %1210
  %1212 = vrot.lane.b32.xlu0 %v402, 111
  %v1213 = vpop.permute.xlu0 %1212
  %1214 = vrot.lane.b32.xlu0 %v406, 111
  %v1215 = vpop.permute.xlu0 %1214
  %1216 = vrot.lane.b32.xlu0 %v395, 111
  %v1217 = vpop.permute.xlu0 %1216
  %1218 = vrot.lane.b32.xlu0 %v399, 111
  %v1219 = vpop.permute.xlu0 %1218
  %1220 = vrot.lane.b32.xlu0 %v403, 111
  %v1221 = vpop.permute.xlu0 %1220
  %1222 = vrot.lane.b32.xlu0 %v407, 111
  %v1223 = vpop.permute.xlu0 %1222
  %vm1224 = vcmp.lt.s32.totalorder %v441, 111
  %v1225 = vsel %vm1224, %v1209, %v1217
  %v1226 = vsel %vm1224, %v1211, %v1219
  %v1227 = vsel %vm1224, %v1213, %v1221
  %v1228 = vsel %vm1224, %v1215, %v1223
  %v1229 = vsel %vm1224, %v1201, %v1209
  %v1230 = vsel %vm1224, %v1203, %v1211
  %v1231 = vsel %vm1224, %v1205, %v1213
  %v1232 = vsel %vm1224, %v1207, %v1215
  %v1233 = vsel %vm1224, %v1193, %v1201
  %v1234 = vsel %vm1224, %v1195, %v1203
  %v1235 = vsel %vm1224, %v1197, %v1205
  %v1236 = vsel %vm1224, %v1199, %v1207
  %v1237 = vsel %vm1224, %v1217, %v1193
  %v1238 = vsel %vm1224, %v1219, %v1195
  %v1239 = vsel %vm1224, %v1221, %v1197
  %v1240 = vsel %vm1224, %v1223, %v1199
  %s1241 = scalar_lea.vmem %s3, 32
  %v1242 = vld [vmem:[%s1241] ss:$8 sm:$0xf]
  %v1244 = vlaneseq
  %v1245 = vshrl.u32 %v1244, 7
  %v1246 = vsub.s32 0, %v1245
  %v1247 = vrot.slane %v1242, %v1246
  %v1248 = vlaneseq
  %v1249 = vshrl.u32 %v1248, 7
  %v1250 = vsub.s32 1, %v1249
  %v1251 = vrot.slane %v1242, %v1250
  %v1252 = vlaneseq
  %v1253 = vshrl.u32 %v1252, 7
  %v1254 = vsub.s32 2, %v1253
  %v1255 = vrot.slane %v1242, %v1254
  %v1256 = vlaneseq
  %v1257 = vshrl.u32 %v1256, 7
  %v1258 = vsub.s32 3, %v1257
  %v1259 = vrot.slane %v1242, %v1258
  %v1264 = vmul.f32 %v1233, %v1247
  %v1265 = vmul.f32 %v1229, %v1251
  %v1266 = vmul.f32 %v1225, %v1255
  %v1267 = vmul.f32 %v1237, %v1259
  %v1268 = vmul.f32 %v1234, %v1247
  %v1269 = vmul.f32 %v1230, %v1251
  %v1270 = vmul.f32 %v1226, %v1255
  %v1271 = vmul.f32 %v1238, %v1259
  %v1272 = vmul.f32 %v1235, %v1247
  %v1273 = vmul.f32 %v1231, %v1251
  %v1274 = vmul.f32 %v1227, %v1255
  %v1275 = vmul.f32 %v1239, %v1259
  %v1276 = vmul.f32 %v1236, %v1247
  %v1277 = vmul.f32 %v1232, %v1251
  %v1278 = vmul.f32 %v1228, %v1255
  %v1279 = vmul.f32 %v1240, %v1259
  %v1280 = vpack.c.bf16 %v1268, %v1264
  %v1281 = vpack.c.bf16 %v1269, %v1265
  %v1282 = vpack.c.bf16 %v1270, %v1266
  %v1283 = vpack.c.bf16 %v1271, %v1267
  %v1284 = vpack.c.bf16 %v1276, %v1272
  %v1285 = vpack.c.bf16 %v1277, %v1273
  %v1286 = vpack.c.bf16 %v1278, %v1274
  %v1287 = vpack.c.bf16 %v1279, %v1275
  %1288 = vst [vmem:[#allocation2 + $0x200] sm:$0xff] %v1280
  %1289 = vst [vmem:[#allocation2 + $0x208] sm:$0xff] %v1281
  %1290 = vst [vmem:[#allocation2 + $0x210] sm:$0xff] %v1282
  %1291 = vst [vmem:[#allocation2 + $0x218] sm:$0xff] %v1283
  %1292 = vst [vmem:[#allocation2 + $0x220] sm:$0xff] %v1284
  %1293 = vst [vmem:[#allocation2 + $0x228] sm:$0xff] %v1285
  %1294 = vst [vmem:[#allocation2 + $0x230] sm:$0xff] %v1286
  %1295 = vst [vmem:[#allocation2 + $0x238] sm:$0xff] %v1287
  %v1296 = vld [vmem:[%s2] sm:$0x3f]
  %v1297 = vld [vmem:[#allocation2] sm:$0xff]
  %v1298 = vld [vmem:[#allocation2 + $0x8] sm:$0xff]
  %v1299 = vld [vmem:[#allocation2 + $0x10] sm:$0xff]
  %v1300 = vld [vmem:[#allocation2 + $0x18] sm:$0xff]
  %v1301 = vld [vmem:[#allocation2 + $0x20] sm:$0xff]
  %v1302 = vld [vmem:[#allocation2 + $0x28] sm:$0xff]
  %v1303 = vld [vmem:[#allocation2 + $0x30] sm:$0xff]
  %v1304 = vld [vmem:[#allocation2 + $0x38] sm:$0xff]
  %v1305 = vld [vmem:[#allocation2 + $0x40] sm:$0xff]
  %v1306 = vld [vmem:[#allocation2 + $0x48] sm:$0xff]
  %v1307 = vld [vmem:[#allocation2 + $0x50] sm:$0xff]
  %v1308 = vld [vmem:[#allocation2 + $0x58] sm:$0xff]
  %v1309 = vld [vmem:[#allocation2 + $0x60] sm:$0xff]
  %v1310 = vld [vmem:[#allocation2 + $0x68] sm:$0xff]
  %v1311 = vld [vmem:[#allocation2 + $0x70] sm:$0xff]
  %v1312 = vld [vmem:[#allocation2 + $0x78] sm:$0xff]
  %v1313 = vld [vmem:[#allocation2 + $0x80] sm:$0xff]
  %v1314 = vld [vmem:[#allocation2 + $0x88] sm:$0xff]
  %v1315 = vld [vmem:[#allocation2 + $0x90] sm:$0xff]
  %v1316 = vld [vmem:[#allocation2 + $0x98] sm:$0xff]
  %v1317 = vld [vmem:[#allocation2 + $0xa0] sm:$0xff]
  %v1318 = vld [vmem:[#allocation2 + $0xa8] sm:$0xff]
  %v1319 = vld [vmem:[#allocation2 + $0xb0] sm:$0xff]
  %v1320 = vld [vmem:[#allocation2 + $0xb8] sm:$0xff]
  %v1321 = vld [vmem:[#allocation2 + $0xc0] sm:$0xff]
  %v1322 = vld [vmem:[#allocation2 + $0xc8] sm:$0xff]
  %v1323 = vld [vmem:[#allocation2 + $0xd0] sm:$0xff]
  %v1324 = vld [vmem:[#allocation2 + $0xd8] sm:$0xff]
  %v1325 = vld [vmem:[#allocation2 + $0xe0] sm:$0xff]
  %v1326 = vld [vmem:[#allocation2 + $0xe8] sm:$0xff]
  %v1327 = vld [vmem:[#allocation2 + $0xf0] sm:$0xff]
  %v1328 = vld [vmem:[#allocation2 + $0xf8] sm:$0xff]
  %v1329 = vld [vmem:[#allocation2 + $0x100] sm:$0xff]
  %v1330 = vld [vmem:[#allocation2 + $0x108] sm:$0xff]
  %v1331 = vld [vmem:[#allocation2 + $0x110] sm:$0xff]
  %v1332 = vld [vmem:[#allocation2 + $0x118] sm:$0xff]
  %v1333 = vld [vmem:[#allocation2 + $0x120] sm:$0xff]
  %v1334 = vld [vmem:[#allocation2 + $0x128] sm:$0xff]
  %v1335 = vld [vmem:[#allocation2 + $0x130] sm:$0xff]
  %v1336 = vld [vmem:[#allocation2 + $0x138] sm:$0xff]
  %v1337 = vld [vmem:[#allocation2 + $0x140] sm:$0xff]
  %v1338 = vld [vmem:[#allocation2 + $0x148] sm:$0xff]
  %v1339 = vld [vmem:[#allocation2 + $0x150] sm:$0xff]
  %v1340 = vld [vmem:[#allocation2 + $0x158] sm:$0xff]
  %v1341 = vld [vmem:[#allocation2 + $0x160] sm:$0xff]
  %v1342 = vld [vmem:[#allocation2 + $0x168] sm:$0xff]
  %v1343 = vld [vmem:[#allocation2 + $0x170] sm:$0xff]
  %v1344 = vld [vmem:[#allocation2 + $0x178] sm:$0xff]
  %v1345 = vld [vmem:[#allocation2 + $0x180] sm:$0xff]
  %v1346 = vld [vmem:[#allocation2 + $0x188] sm:$0xff]
  %v1347 = vld [vmem:[#allocation2 + $0x190] sm:$0xff]
  %v1348 = vld [vmem:[#allocation2 + $0x198] sm:$0xff]
  %v1349 = vld [vmem:[#allocation2 + $0x1a0] sm:$0xff]
  %v1350 = vld [vmem:[#allocation2 + $0x1a8] sm:$0xff]
  %v1351 = vld [vmem:[#allocation2 + $0x1b0] sm:$0xff]
  %v1352 = vld [vmem:[#allocation2 + $0x1b8] sm:$0xff]
  %v1353 = vld [vmem:[#allocation2 + $0x1c0] sm:$0xff]
  %v1354 = vld [vmem:[#allocation2 + $0x1c8] sm:$0xff]
  %v1355 = vld [vmem:[#allocation2 + $0x1d0] sm:$0xff]
  %v1356 = vld [vmem:[#allocation2 + $0x1d8] sm:$0xff]
  %v1357 = vld [vmem:[#allocation2 + $0x1e0] sm:$0xff]
  %v1358 = vld [vmem:[#allocation2 + $0x1e8] sm:$0xff]
  %v1359 = vld [vmem:[#allocation2 + $0x1f0] sm:$0xff]
  %v1360 = vld [vmem:[#allocation2 + $0x1f8] sm:$0xff]
  %v1361 = vld [vmem:[#allocation2 + $0x200] sm:$0xff]
  %v1362 = vld [vmem:[#allocation2 + $0x208] sm:$0xff]
  %v1363 = vld [vmem:[#allocation2 + $0x210] sm:$0xff]
  %v1364 = vld [vmem:[#allocation2 + $0x218] sm:$0xff]
  %v1365 = vld [vmem:[#allocation2 + $0x220] sm:$0xff]
  %v1366 = vld [vmem:[#allocation2 + $0x228] sm:$0xff]
  %v1367 = vld [vmem:[#allocation2 + $0x230] sm:$0xff]
  %v1368 = vld [vmem:[#allocation2 + $0x238] sm:$0xff]
  %v1369 = vld [vmem:[%s4] sm:$0x7]
  %1371 = vset.pattern.permute.xlu0 3
  %1372 = vperm.xlu0 %1371, %v1369
  %v1373 = vpop.permute.xlu0 %1372
  %v1376 = vcombine.high %v1296, %v1296
  %v1378 = vunpack.c.l.s4 1983009808
  %v1379 = vunpack.c.0.s8 %v1378
  %v1380 = vlaneseq
  %v1381 = vshrl.u32 %v1380, 7
  %v1382 = vsub.s32 %v1379, %v1381
  %v1383 = vrot.slane %v1296, %v1382
  %v1385 = vunpack.c.l.s4 1983009808
  %v1386 = vunpack.c.0.s8 %v1385
  %v1387 = vlaneseq
  %v1388 = vshrl.u32 %v1387, 7
  %v1389 = vsub.s32 %v1386, %v1388
  %v1390 = vrot.slane %v1376, %v1389
  %v1391 = vcombine.high %v1383, %v1383
  %vm1394 = vcmask 261120
  %v1396 = vsel %vm1394, %v1390, 0
  %1398 = vmatprep.subr.bf16.mxu0 %v1298
  %1399 = vmatpush1.bf16.msra.mxu0 %v1297
  %1400 = vmatprep.subr.bf16.mxu0 %v1302
  %1401 = vmatpush1.bf16.msra.mxu0 %v1301
  %1402 = vmatprep.subr.bf16.mxu0 %v1306
  %1403 = vmatpush1.bf16.msra.mxu0 %v1305
  %1404 = vmatprep.subr.bf16.mxu0 %v1310
  %1405 = vmatpush1.bf16.msra.mxu0 %v1309
  %1406 = vmatprep.subr.bf16.mxu0 %v1314
  %1407 = vmatpush1.bf16.msra.mxu0 %v1313
  %1408 = vmatprep.subr.bf16.mxu0 %v1318
  %1409 = vmatpush1.bf16.msra.mxu0 %v1317
  %1410 = vmatprep.subr.bf16.mxu0 %v1322
  %1411 = vmatpush1.bf16.msra.mxu0 %v1321
  %1412 = vmatprep.subr.bf16.mxu0 %v1326
  %1413 = vmatpush1.bf16.msra.mxu0 %v1325
  %1414 = vmatprep.subr.bf16.mxu0 %v1330
  %1415 = vmatpush1.bf16.msra.mxu0 %v1329
  %1416 = vmatprep.subr.bf16.mxu0 %v1334
  %1417 = vmatpush1.bf16.msra.mxu0 %v1333
  %1418 = vmatprep.subr.bf16.mxu0 %v1338
  %1419 = vmatpush1.bf16.msra.mxu0 %v1337
  %1420 = vmatprep.subr.bf16.mxu0 %v1342
  %1421 = vmatpush1.bf16.msra.mxu0 %v1341
  %1422 = vmatprep.subr.bf16.mxu0 %v1346
  %1423 = vmatpush1.bf16.msra.mxu0 %v1345
  %1424 = vmatprep.subr.bf16.mxu0 %v1350
  %1425 = vmatpush1.bf16.msra.mxu0 %v1349
  %1426 = vmatprep.subr.bf16.mxu0 %v1354
  %1427 = vmatpush1.bf16.msra.mxu0 %v1353
  %1428 = vmatprep.subr.bf16.mxu0 %v1358
  %1429 = vmatpush1.bf16.msra.mxu0 %v1357
  %1430 = vmatprep.mubr.bf16.mxu0 %v1391
  %1431 = vmatmul.mubr.bf16.gmra.mrb[0].mxu0 %v1383
  %v1432 = vpop.f32.mrb[0].mxu0
  %v1433 = vadd.f32 %v1373, %v1432
  %v1434 = vpop.f32.mrb[0].mxu0
  %v1435 = vadd.f32 %v1373, %v1434
  %v1436 = vpop.f32.mrb[0].mxu0
  %v1437 = vpop.f32.mrb[0].mxu0
  %1438 = vdwg.mxu0
  %1439 = vmatprep.subr.bf16.mxu0 %v1362
  %1440 = vmatpush1.bf16.msra.mxu0 %v1361
  %1441 = vmatprep.subr.bf16.mxu0 %v1366
  %1442 = vmatpush1.bf16.msra.mxu0 %v1365
  %1443 = vmatprep.subr.bf16.mxu0 0
  %1444 = vmatpush1.bf16.msra.mxu0 0
  %1445 = vmatprep.subr.bf16.mxu0 0
  %1446 = vmatpush1.bf16.msra.mxu0 0
  %1447 = vmatprep.subr.bf16.mxu0 0
  %1448 = vmatpush1.bf16.msra.mxu0 0
  %1449 = vmatprep.subr.bf16.mxu0 0
  %1450 = vmatpush1.bf16.msra.mxu0 0
  %1451 = vmatprep.subr.bf16.mxu0 0
  %1452 = vmatpush1.bf16.msra.mxu0 0
  %1453 = vmatprep.subr.bf16.mxu0 0
  %1454 = vmatpush1.bf16.msra.mxu0 0
  %1455 = vmatprep.subr.bf16.mxu0 0
  %1456 = vmatpush1.bf16.msra.mxu0 0
  %1457 = vmatprep.subr.bf16.mxu0 0
  %1458 = vmatpush1.bf16.msra.mxu0 0
  %1459 = vmatprep.subr.bf16.mxu0 0
  %1460 = vmatpush1.bf16.msra.mxu0 0
  %1461 = vmatprep.subr.bf16.mxu0 0
  %1462 = vmatpush1.bf16.msra.mxu0 0
  %1463 = vmatprep.subr.bf16.mxu0 0
  %1464 = vmatpush1.bf16.msra.mxu0 0
  %1465 = vmatprep.subr.bf16.mxu0 0
  %1466 = vmatpush1.bf16.msra.mxu0 0
  %1467 = vmatprep.subr.bf16.mxu0 0
  %1468 = vmatpush1.bf16.msra.mxu0 0
  %1469 = vmatprep.subr.bf16.mxu0 0
  %1470 = vmatpush1.bf16.msra.mxu0 0
  %1471 = vmatprep.mubr.bf16.mxu0 0
  %1472 = vmatmul.mubr.bf16.gmra.mrb[0].mxu0 %v1396
  %v1473 = vpop.f32.mrb[0].mxu0
  %v1474 = vadd.f32 %v1433, %v1473
  %v1475 = vpop.f32.mrb[0].mxu0
  %v1476 = vadd.f32 %v1435, %v1475
  %v1477 = vpop.f32.mrb[0].mxu0
  %v1478 = vpop.f32.mrb[0].mxu0
  %1479 = vdwg.mxu0
  %1480 = vmatprep.subr.bf16.mxu0 %v1300
  %1481 = vmatpush1.bf16.msra.mxu0 %v1299
  %1482 = vmatprep.subr.bf16.mxu0 %v1304
  %1483 = vmatpush1.bf16.msra.mxu0 %v1303
  %1484 = vmatprep.subr.bf16.mxu0 %v1308
  %1485 = vmatpush1.bf16.msra.mxu0 %v1307
  %1486 = vmatprep.subr.bf16.mxu0 %v1312
  %1487 = vmatpush1.bf16.msra.mxu0 %v1311
  %1488 = vmatprep.subr.bf16.mxu0 %v1316
  %1489 = vmatpush1.bf16.msra.mxu0 %v1315
  %1490 = vmatprep.subr.bf16.mxu0 %v1320
  %1491 = vmatpush1.bf16.msra.mxu0 %v1319
  %1492 = vmatprep.subr.bf16.mxu0 %v1324
  %1493 = vmatpush1.bf16.msra.mxu0 %v1323
  %1494 = vmatprep.subr.bf16.mxu0 %v1328
  %1495 = vmatpush1.bf16.msra.mxu0 %v1327
  %1496 = vmatprep.subr.bf16.mxu0 %v1332
  %1497 = vmatpush1.bf16.msra.mxu0 %v1331
  %1498 = vmatprep.subr.bf16.mxu0 %v1336
  %1499 = vmatpush1.bf16.msra.mxu0 %v1335
  %1500 = vmatprep.subr.bf16.mxu0 %v1340
  %1501 = vmatpush1.bf16.msra.mxu0 %v1339
  %1502 = vmatprep.subr.bf16.mxu0 %v1344
  %1503 = vmatpush1.bf16.msra.mxu0 %v1343
  %1504 = vmatprep.subr.bf16.mxu0 %v1348
  %1505 = vmatpush1.bf16.msra.mxu0 %v1347
  %1506 = vmatprep.subr.bf16.mxu0 %v1352
  %1507 = vmatpush1.bf16.msra.mxu0 %v1351
  %1508 = vmatprep.subr.bf16.mxu0 %v1356
  %1509 = vmatpush1.bf16.msra.mxu0 %v1355
  %1510 = vmatprep.subr.bf16.mxu0 %v1360
  %1511 = vmatpush1.bf16.msra.mxu0 %v1359
  %1512 = vmatprep.mubr.bf16.mxu0 %v1391
  %1513 = vmatmul.mubr.bf16.gmra.mrb[0].mxu0 %v1383
  %v1514 = vpop.f32.mrb[0].mxu0
  %v1515 = vadd.f32 %v1373, %v1514
  %v1516 = vpop.f32.mrb[0].mxu0
  %v1517 = vadd.f32 %v1373, %v1516
  %v1518 = vpop.f32.mrb[0].mxu0
  %v1519 = vpop.f32.mrb[0].mxu0
  %1520 = vdwg.mxu0
  %1521 = vmatprep.subr.bf16.mxu0 %v1364
  %1522 = vmatpush1.bf16.msra.mxu0 %v1363
  %1523 = vmatprep.subr.bf16.mxu0 %v1368
  %1524 = vmatpush1.bf16.msra.mxu0 %v1367
  %1525 = vmatprep.subr.bf16.mxu0 0
  %1526 = vmatpush1.bf16.msra.mxu0 0
  %1527 = vmatprep.subr.bf16.mxu0 0
  %1528 = vmatpush1.bf16.msra.mxu0 0
  %1529 = vmatprep.subr.bf16.mxu0 0
  %1530 = vmatpush1.bf16.msra.mxu0 0
  %1531 = vmatprep.subr.bf16.mxu0 0
  %1532 = vmatpush1.bf16.msra.mxu0 0
  %1533 = vmatprep.subr.bf16.mxu0 0
  %1534 = vmatpush1.bf16.msra.mxu0 0
  %1535 = vmatprep.subr.bf16.mxu0 0
  %1536 = vmatpush1.bf16.msra.mxu0 0
  %1537 = vmatprep.subr.bf16.mxu0 0
  %1538 = vmatpush1.bf16.msra.mxu0 0
  %1539 = vmatprep.subr.bf16.mxu0 0
  %1540 = vmatpush1.bf16.msra.mxu0 0
  %1541 = vmatprep.subr.bf16.mxu0 0
  %1542 = vmatpush1.bf16.msra.mxu0 0
  %1543 = vmatprep.subr.bf16.mxu0 0
  %1544 = vmatpush1.bf16.msra.mxu0 0
  %1545 = vmatprep.subr.bf16.mxu0 0
  %1546 = vmatpush1.bf16.msra.mxu0 0
  %1547 = vmatprep.subr.bf16.mxu0 0
  %1548 = vmatpush1.bf16.msra.mxu0 0
  %1549 = vmatprep.subr.bf16.mxu0 0
  %1550 = vmatpush1.bf16.msra.mxu0 0
  %1551 = vmatprep.subr.bf16.mxu0 0
  %1552 = vmatpush1.bf16.msra.mxu0 0
  %1553 = vmatprep.mubr.bf16.mxu0 0
  %1554 = vmatmul.mubr.bf16.gmra.mrb[0].mxu0 %v1396
  %v1555 = vpop.f32.mrb[0].mxu0
  %v1556 = vadd.f32 %v1515, %v1555
  %v1557 = vpop.f32.mrb[0].mxu0
  %v1558 = vadd.f32 %v1517, %v1557
  %v1559 = vpop.f32.mrb[0].mxu0
  %v1560 = vpop.f32.mrb[0].mxu0
  %1561 = vdwg.mxu0
  %v1566 = vcombine.low %v1474, %v1476
  %v1567 = vcombine.low %v1556, %v1558
  %1570 = vst [vmem:[%s5] sm:$0x77] %v1566
  %1571 = vst [vmem:[%s5 + $0x8] sm:$0x77] %v1567
  // Predicated region
  $region22: #{simple_cnn_forward.1} parent=0 // pred_check
    _
  $region23: #{simple_cnn_forward.1} parent=0 // pred_check_branch
    %1573 = sbr.rel (0) target = $region25
  $region24: #{simple_cnn_forward.1} parent=0 // pred_region
    _
  $region25: #{simple_cnn_forward.1} parent=0 // pred_fallthru
    _
  // Predicated region
  $region26: #{simple_cnn_forward.1} parent=0 // pred_check
    _
  $region27: #{simple_cnn_forward.1} parent=0 // pred_check_branch
    %1575 = sbr.rel (0) target = $region29
  $region28: #{simple_cnn_forward.1} parent=0 // pred_region
    _
  $region29: #{simple_cnn_forward.1} parent=0 // pred_fallthru
    _

</llo_original>
